<compile_context>
chip_gen: v7x
topology: tpu7x:2x2x1
jax: 0.10.0
libtpu: 0.0.40
codegen_flags: <defaults>
</compile_context>

<pallas_src>
import math
import functools

import jax
import jax.numpy as jnp
import numpy as np
from jax import lax
from jax.experimental import pallas as pl
from jax.experimental.pallas import tpu as pltpu


def _physical_vmem_bytes():
    """Physical VMEM per TensorCore; falls back to the v7x-safe 64 MiB."""
    try:
        info = pltpu.get_tpu_info()
        for attr in ("vmem_capacity_bytes", "vmem_size_bytes", "vmem_bytes"):
            v = getattr(info, attr, None)
            if v:
                return int(v)
    except Exception:
        pass
    return 64 * 1024 * 1024


def _choose_heads_per_group(num_heads, head_size, hidden, target_width=256):
    """Group heads so the group lane width is a multiple of 128, targeting 256
    (fills the 256-wide MXU on v6e/v7x; amortizes RHS push/drain on v5e)."""
    best, best_width = None, 0
    for hpg in range(1, num_heads + 1):
        if num_heads % hpg:
            continue
        gw = hpg * head_size
        if gw % 128 == 0 and gw <= target_width and gw > best_width:
            best, best_width = hpg, gw
    if best is not None:
        return best
    return num_heads  # one full-width group (gw == hidden) is always a legal block


def _estimate_vmem(S, H, gw, hpg, head_size, block_q, itemsize, out_itemsize,
                   with_probs, probs_itemsize):
    est = (2 * S * H * itemsize              # x block (double-buffered)
           + 2 * S * 4                       # additive mask block
           + 2 * H * 3 * gw * itemsize       # fused QKV weight block
           + 2 * 3 * gw * 4                  # fused bias block
           + 2 * block_q * gw * out_itemsize     # ctx output tile
           + S * 2 * gw * itemsize           # K|V scratch (single buffer)
           + S * 2 * gw * 4                  # f32 K|V projection temporary
           + 4 * block_q * S * 4             # score/prob live temporaries
           + hpg * block_q * head_size * 4   # unrolled per-head ctx parts (f32)
           + 2 * block_q * gw * 4)           # q tile + concat temporary
    if with_probs:
        est += 2 * hpg * block_q * S * probs_itemsize
    return est


def _choose_block_q(S, est_fn, vmem_cap):
    if S <= 512:
        return S
    cands = [c for c in (512, 256, 128) if S % c == 0]
    for c in cands:
        if est_fn(c) * 1.4 <= vmem_cap:
            return c
    return cands[-1] if cands else S


def _attn_kernel(x_ref, mask_ref, wqkv_ref, bqkv_ref, *out_and_scratch,
                 heads_per_group, head_size, block_q, with_probs, compute_dtype):
    """One (batch, head_group, query_tile) step.

    x_ref:     (1, S, H)    compute_dtype   (full sequence; fetched once per batch)
    mask_ref:  (1, 1, 1, S) f32 additive mask
    wqkv_ref:  (H, 3*gw)    compute_dtype   [Q_g | K_g | V_g] weight slab
    bqkv_ref:  (1, 3*gw)    f32             [bq_g | bk_g | bv_g]
    ctx_ref:   (1, block_q, gw)
    probs_ref: (1, hpg, block_q, S)         (only when with_probs)
    kv_scr:    (S, 2*gw) VMEM scratch, persistent across the query-tile sweep.
    """
    if with_probs:
        ctx_ref, probs_ref, kv_scr = out_and_scratch
    else:
        ctx_ref, kv_scr = out_and_scratch
        probs_ref = None

    qi = pl.program_id(2)
    gw = heads_per_group * head_size
    scale = 1.0 / math.sqrt(head_size)

    # --- fused K|V projection for this (batch, head-group): once per query sweep ---
    @pl.when(qi == 0)
    def _project_kv():
        x_all = x_ref[0]                                              # (S, H)
        kv = jnp.dot(x_all, wqkv_ref[:, gw:],
                     preferred_element_type=jnp.float32) + bqkv_ref[:, gw:]
        kv_scr[...] = kv.astype(kv_scr.dtype)                         # [K_g | V_g]

    # --- Q projection for this query tile; 1/sqrt(hd) folded into Q (hoisted) ---
    row0 = pl.multiple_of(qi * block_q, block_q)
    xq = x_ref[0, pl.ds(row0, block_q), :]                            # (bq, H)
    q = jnp.dot(xq, wqkv_ref[:, :gw],
                preferred_element_type=jnp.float32) + bqkv_ref[:, :gw]
    q = (q * scale).astype(compute_dtype)                             # (bq, gw)

    # Mask kept as a (1, S) row; sublane broadcast happens inside the add.
    mask_row = mask_ref[0, 0].astype(jnp.float32)                     # (1, S)

    ctx_parts = []
    for h in range(heads_per_group):
        lo = h * head_size
        qh = q[:, lo:lo + head_size]                                  # (bq, hd)
        kh = kv_scr[:, lo:lo + head_size]                             # (S,  hd)
        vh = kv_scr[:, gw + lo:gw + lo + head_size]                   # (S,  hd)

        # q @ k^T via dot_general contracting dim 1 of both (no XLU transpose).
        s = lax.dot_general(qh, kh, (((1,), (1,)), ((), ())),
                            preferred_element_type=jnp.float32)       # (bq, S)
        s = s + mask_row
        s = s - jnp.max(s, axis=-1, keepdims=True)
        p = jnp.exp(s)
        denom = jnp.sum(p, axis=-1, keepdims=True)

        if with_probs:
            p = p / denom                          # exact: probs are an external output
            probs_ref[0, h] = p.astype(probs_ref.dtype)
        else:
            p = p * pl.reciprocal(denom, approx=True)

        ctx_parts.append(jnp.dot(p.astype(compute_dtype), vh,
                                 preferred_element_type=jnp.float32))

    # One lane-dense store of the whole head-group slab (width = hpg * hd).
    ctx_ref[0] = jnp.concatenate(ctx_parts, axis=-1).astype(ctx_ref.dtype)


def elasticbert_self_attention(hidden_states, attention_mask, params, num_heads,
                               output_attentions=False,
                               compute_dtype=jnp.bfloat16,
                               probs_dtype=None):
    B, S, H = hidden_states.shape
    assert H % num_heads == 0
    head_size = H // num_heads

    hpg = _choose_heads_per_group(num_heads, head_size, H)
    gw = hpg * head_size
    num_groups = num_heads // hpg

    cd = np.dtype(compute_dtype)
    out_dtype = hidden_states.dtype
    out_itemsize = np.dtype(out_dtype).itemsize
    probs_dtype = out_dtype if probs_dtype is None else probs_dtype
    probs_itemsize = np.dtype(probs_dtype).itemsize

    phys_vmem = _physical_vmem_bytes()
    vmem_cap = int(0.75 * phys_vmem)

    est_fn = lambda bq: _estimate_vmem(S, H, gw, hpg, head_size, bq, cd.itemsize,
                                       out_itemsize, output_attentions,
                                       probs_itemsize)
    block_q = _choose_block_q(S, est_fn, vmem_cap)
    num_q_tiles = S // block_q

    if attention_mask is None:
        attention_mask = jnp.zeros((B, 1, 1, S), dtype=jnp.float32)
    attention_mask = attention_mask.reshape(B, 1, 1, S).astype(jnp.float32)

    # Glue: pre-transpose PyTorch-style (out, in) weights so the kernel does x @ W,
    # regroup columns head-group-major, and fuse Q|K|V into one slab per group so a
    # head group needs exactly one weight DMA and one bias DMA.
    x = hidden_states.astype(cd)

    def _group_cols(w):  # (out=H, in=H) -> (H_in, num_groups, gw)
        return w.T.astype(cd).reshape(H, num_groups, gw)

    wqkv = jnp.concatenate(
        [_group_cols(params["wq"]), _group_cols(params["wk"]),
         _group_cols(params["wv"])], axis=2).reshape(H, num_groups * 3 * gw)
    bqkv = jnp.concatenate(
        [params["bq"].astype(jnp.float32).reshape(num_groups, gw),
         params["bk"].astype(jnp.float32).reshape(num_groups, gw),
         params["bv"].astype(jnp.float32).reshape(num_groups, gw)],
        axis=1).reshape(1, num_groups * 3 * gw)

    kernel = functools.partial(
        _attn_kernel,
        heads_per_group=hpg, head_size=head_size, block_q=block_q,
        with_probs=output_attentions, compute_dtype=cd)

    # Megacore balance: if batch is odd but #groups is even, lead with the group
    # axis so v7x's two TensorCores split an even parallel extent.
    swap_bg = (B % 2 == 1) and (num_groups % 2 == 0)
    if swap_bg:
        grid = (num_groups, B, num_q_tiles)
        def _bg(a0, a1): return a1, a0
    else:
        grid = (B, num_groups, num_q_tiles)
        def _bg(a0, a1): return a0, a1

    def ix_x(a0, a1, qi):
        b, g = _bg(a0, a1); return (b, 0, 0)

    def ix_mask(a0, a1, qi):
        b, g = _bg(a0, a1); return (b, 0, 0, 0)

    def ix_w(a0, a1, qi):
        b, g = _bg(a0, a1); return (0, g)

    def ix_ctx(a0, a1, qi):
        b, g = _bg(a0, a1); return (b, qi, g)

    def ix_probs(a0, a1, qi):
        b, g = _bg(a0, a1); return (b, g, qi, 0)

    in_specs = [
        pl.BlockSpec((1, S, H), ix_x),            # x (full sequence)
        pl.BlockSpec((1, 1, 1, S), ix_mask),      # additive mask
        pl.BlockSpec((H, 3 * gw), ix_w),          # fused [Q|K|V] weight slab
        pl.BlockSpec((1, 3 * gw), ix_w),          # fused bias slab
    ]

    out_shapes = [jax.ShapeDtypeStruct((B, S, H), out_dtype)]
    out_specs = [pl.BlockSpec((1, block_q, gw), ix_ctx)]
    if output_attentions:
        out_shapes.append(jax.ShapeDtypeStruct((B, num_heads, S, S), probs_dtype))
        out_specs.append(pl.BlockSpec((1, hpg, block_q, S), ix_probs))

    vmem_est = est_fn(block_q)
    vmem_limit = int(min(max(int(vmem_est * 1.5), 32 * 1024 * 1024), vmem_cap))

    results = pl.pallas_call(
        kernel,
        out_shape=tuple(out_shapes),
        grid_spec=pltpu.PrefetchScalarGridSpec(
            num_scalar_prefetch=0,
            grid=grid,
            in_specs=in_specs,
            out_specs=tuple(out_specs),
            scratch_shapes=[pltpu.VMEM((S, 2 * gw), cd)],  # K|V scratch per group
        ),
        compiler_params=pltpu.CompilerParams(
            dimension_semantics=("parallel", "parallel", "arbitrary"),
            vmem_limit_bytes=vmem_limit),
    )(x, attention_mask, wqkv, bqkv)

    if not isinstance(results, (list, tuple)):
        results = (results,)
    if output_attentions:
        ctx, probs = results
        return ctx, probs
    return (results[0],)


def _reference(hidden_states, attention_mask, params, num_heads):
    """Plain-JAX reference matching the PyTorch forward (f32)."""
    B, S, H = hidden_states.shape
    hd = H // num_heads

    def lin(x, w, b):
        return jnp.einsum("bsh,oh->bso", x, w) + b

    q = lin(hidden_states, params["wq"], params["bq"])
    k = lin(hidden_states, params["wk"], params["bk"])
    v = lin(hidden_states, params["wv"], params["bv"])

    def split(x):  # (B,S,H) -> (B,nh,S,hd)
        return x.reshape(B, S, num_heads, hd).transpose(0, 2, 1, 3)

    q, k, v = split(q), split(k), split(v)
    scores = jnp.einsum("bhqd,bhkd->bhqk", q, k) / math.sqrt(hd)
    scores = scores + attention_mask  # (B,1,1,S) broadcast
    probs = jax.nn.softmax(scores, axis=-1)
    ctx = jnp.einsum("bhqk,bhkd->bhqd", probs, v)
    ctx = ctx.transpose(0, 2, 1, 3).reshape(B, S, H)
    return ctx, probs


def _make_inputs(key, B, S, H, masked_tail=2):
    keys = jax.random.split(key, 8)
    hidden_states = jax.random.normal(keys[0], (B, S, H), dtype=jnp.float32)
    valid_len = jnp.maximum(jnp.arange(B) * 0 + S - masked_tail, 1)
    valid_len = valid_len.at[0].set(S)
    pos = jnp.arange(S)[None, :]
    mask01 = (pos < valid_len[:, None]).astype(jnp.float32)           # (B, S)
    attention_mask = (1.0 - mask01)[:, None, None, :] * -10000.0      # (B,1,1,S)
    scale = 1.0 / math.sqrt(H)
    params = {
        "wq": jax.random.normal(keys[1], (H, H), dtype=jnp.float32) * scale,
        "bq": jax.random.normal(keys[2], (H,), dtype=jnp.float32) * 0.02,
        "wk": jax.random.normal(keys[3], (H, H), dtype=jnp.float32) * scale,
        "bk": jax.random.normal(keys[4], (H,), dtype=jnp.float32) * 0.02,
        "wv": jax.random.normal(keys[5], (H, H), dtype=jnp.float32) * scale,
        "bv": jax.random.normal(keys[6], (H,), dtype=jnp.float32) * 0.02,
    }
    return hidden_states, attention_mask, params


if __name__ == "__main__":
    key = jax.random.PRNGKey(0)
    k1, k2, k3 = jax.random.split(key, 3)

    # ---- Case 1: small config consistent with the module (B=2, S=8, H=32). ----
    B, S, H, num_heads = 2, 8, 32, 4
    hs, am, params = _make_inputs(k1, B, S, H)
    ref_ctx, ref_probs = _reference(hs, am, params, num_heads)

    # 1a) f32 compute path with attention probs (checks the math tightly; exact softmax).
    ctx32, probs32 = elasticbert_self_attention(
        hs, am, params, num_heads, output_attentions=True,
        compute_dtype=jnp.float32)
    jax.block_until_ready(ctx32); jax.block_until_ready(probs32)
    np.testing.assert_allclose(np.asarray(ctx32), np.asarray(ref_ctx),
                               rtol=5e-3, atol=5e-3)
    np.testing.assert_allclose(np.asarray(probs32), np.asarray(ref_probs),
                               rtol=5e-3, atol=5e-3)

    # 1b) Default bf16 fast path, no attention probs (probs output not built at all).
    (ctx_bf,) = elasticbert_self_attention(
        hs, am, params, num_heads, output_attentions=False)
    jax.block_until_ready(ctx_bf)
    np.testing.assert_allclose(np.asarray(ctx_bf), np.asarray(ref_ctx),
                               rtol=5e-2, atol=5e-2)

    # 1c) bf16 fast path with bf16 attention probs (halves probs HBM writes).
    ctx_bf2, probs_bf = elasticbert_self_attention(
        hs, am, params, num_heads, output_attentions=True,
        probs_dtype=jnp.bfloat16)
    jax.block_until_ready(ctx_bf2); jax.block_until_ready(probs_bf)
    np.testing.assert_allclose(np.asarray(ctx_bf2), np.asarray(ref_ctx),
                               rtol=5e-2, atol=5e-2)
    np.testing.assert_allclose(np.asarray(probs_bf).astype(np.float32),
                               np.asarray(ref_probs), rtol=5e-2, atol=5e-2)

    # ---- Case 2: multi-group + odd batch (exercises 256-wide groups and the
    #      batch/group grid-axis swap for megacore balance). ----
    B, S, H, num_heads = 1, 128, 512, 8
    hs, am, params = _make_inputs(k2, B, S, H, masked_tail=5)
    ref_ctx, ref_probs = _reference(hs, am, params, num_heads)
    ctx32, probs32 = elasticbert_self_attention(
        hs, am, params, num_heads, output_attentions=True,
        compute_dtype=jnp.float32)
    jax.block_until_ready(ctx32); jax.block_until_ready(probs32)
    np.testing.assert_allclose(np.asarray(ctx32), np.asarray(ref_ctx),
                               rtol=5e-3, atol=5e-3)
    np.testing.assert_allclose(np.asarray(probs32), np.asarray(ref_probs),
                               rtol=5e-3, atol=5e-3)

    # ---- Case 3: multi query-tile sweep (K/V scratch reuse across tiles). ----
    B, S, H, num_heads = 1, 1024, 256, 4
    hs, am, params = _make_inputs(k3, B, S, H, masked_tail=17)
    ref_ctx, _ = _reference(hs, am, params, num_heads)
    (ctx_bf,) = elasticbert_self_attention(
        hs, am, params, num_heads, output_attentions=False)
    jax.block_until_ready(ctx_bf)
    np.testing.assert_allclose(np.asarray(ctx_bf), np.asarray(ref_ctx),
                               rtol=5e-2, atol=5e-2)

    print("KERNEL_OK")
</pallas_src>

<mosaic_0001>
module attributes {stable_mosaic.version = 11 : i64} {
  func.func @_attn_kernel(%arg0: i32, %arg1: i32, %arg2: i32, %arg3: memref<1x8x32xf32, #tpu.memory_space<vmem>>, %arg4: memref<1x1x1x8xf32, #tpu.memory_space<vmem>>, %arg5: memref<32x96xf32, #tpu.memory_space<vmem>>, %arg6: memref<1x96xf32, #tpu.memory_space<vmem>>, %arg7: memref<1x8x32xf32, #tpu.memory_space<vmem>>, %arg8: memref<1x4x8x8xf32, #tpu.memory_space<vmem>>, %arg9: memref<8x64xf32, #tpu.memory_space<vmem>>) attributes {dimension_semantics = [#tpu.dimension_semantics<parallel>, #tpu.dimension_semantics<parallel>, #tpu.dimension_semantics<arbitrary>], iteration_bounds = array<i64: 2, 1, 1>, scalar_prefetch = 0 : i64, scratch_operands = 1 : i64, tpu.core_type = #tpu.core_type<tc>, window_params = [{transform_indices = @transform_0, window_bounds = array<i64: 1, 8, 32>}, {transform_indices = @transform_1, window_bounds = array<i64: 1, 1, 1, 8>}, {transform_indices = @transform_2, window_bounds = array<i64: 32, 96>}, {transform_indices = @transform_3, window_bounds = array<i64: 1, 96>}, {transform_indices = @transform_4, window_bounds = array<i64: 1, 8, 32>}, {transform_indices = @transform_5, window_bounds = array<i64: 1, 4, 8, 8>}]} {
    %c0_i32 = arith.constant 0 : i32
    %0 = arith.cmpi eq, %arg2, %c0_i32 : i32
    %1 = arith.extui %0 : i1 to i32
    %c0_i32_0 = arith.constant 0 : i32
    %2 = arith.cmpi ne, %1, %c0_i32_0 : i32
    scf.if %2 {
      %c0_52 = arith.constant 0 : index
      %c0_53 = arith.constant 0 : index
      %c0_54 = arith.constant 0 : index
      %97 = vector.load %arg3[%c0_52, %c0_53, %c0_54] : memref<1x8x32xf32, #tpu.memory_space<vmem>>, vector<1x8x32xf32>
      %98 = vector.shape_cast %97 : vector<1x8x32xf32> to vector<8x32xf32>
      %c0_55 = arith.constant 0 : index
      %c32_56 = arith.constant 32 : index
      %99 = vector.load %arg5[%c0_55, %c32_56] : memref<32x96xf32, #tpu.memory_space<vmem>>, vector<32x64xf32>
      %cst_57 = arith.constant dense<0.000000e+00> : vector<8x64xf32>
      %100 = tpu.matmul %98, %99, %cst_57 {dimension_numbers = #tpu.dot_dimension_numbers<[1], [0], [0], [1], [0, 0, 1, 1], [], []>} : vector<8x32xf32>, vector<32x64xf32>, vector<8x64xf32> -> vector<8x64xf32>
      %c0_58 = arith.constant 0 : index
      %c32_59 = arith.constant 32 : index
      %101 = vector.load %arg6[%c0_58, %c32_59] : memref<1x96xf32, #tpu.memory_space<vmem>>, vector<1x64xf32>
      %102 = vector.broadcast %101 : vector<1x64xf32> to vector<8x64xf32>
      %103 = arith.addf %100, %102 : vector<8x64xf32>
      %c0_60 = arith.constant 0 : index
      %c0_61 = arith.constant 0 : index
      %104 = vector.load %arg9[%c0_60, %c0_61] : memref<8x64xf32, #tpu.memory_space<vmem>>, vector<8x64xf32>
      tpu.vector_store %arg9[%c0_60, %c0_61], %103 {strides = array<i32>} : memref<8x64xf32, #tpu.memory_space<vmem>>, vector<8x64xf32>,
    } else {
    }
    %c8_i32 = arith.constant 8 : i32
    %3 = arith.muli %arg2, %c8_i32 : i32
    %4 = tpu.assume_multiple %3, 8 : i32
    %c0 = arith.constant 0 : index
    %5 = arith.index_cast %4 : i32 to index
    %c0_1 = arith.constant 0 : index
    %6 = vector.load %arg3[%c0, %5, %c0_1] : memref<1x8x32xf32, #tpu.memory_space<vmem>>, vector<1x8x32xf32>
    %7 = vector.shape_cast %6 : vector<1x8x32xf32> to vector<8x32xf32>
    %c0_2 = arith.constant 0 : index
    %c0_3 = arith.constant 0 : index
    %8 = vector.load %arg5[%c0_2, %c0_3] : memref<32x96xf32, #tpu.memory_space<vmem>>, vector<32x32xf32>
    %cst = arith.constant dense<0.000000e+00> : vector<8x32xf32>
    %9 = tpu.matmul %7, %8, %cst {dimension_numbers = #tpu.dot_dimension_numbers<[1], [0], [0], [1], [0, 0, 1, 1], [], []>} : vector<8x32xf32>, vector<32x32xf32>, vector<8x32xf32> -> vector<8x32xf32>
    %c0_4 = arith.constant 0 : index
    %c0_5 = arith.constant 0 : index
    %10 = vector.load %arg6[%c0_4, %c0_5] : memref<1x96xf32, #tpu.memory_space<vmem>>, vector<1x32xf32>
    %11 = vector.broadcast %10 : vector<1x32xf32> to vector<8x32xf32>
    %12 = arith.addf %9, %11 : vector<8x32xf32>
    %cst_6 = arith.constant 0.353553385 : f32
    %13 = vector.broadcast %cst_6 : f32 to vector<8x32xf32>
    %14 = arith.mulf %12, %13 : vector<8x32xf32>
    %c0_7 = arith.constant 0 : index
    %c0_8 = arith.constant 0 : index
    %c0_9 = arith.constant 0 : index
    %c0_10 = arith.constant 0 : index
    %15 = vector.load %arg4[%c0_7, %c0_8, %c0_9, %c0_10] : memref<1x1x1x8xf32, #tpu.memory_space<vmem>>, vector<1x1x1x8xf32>
    %16 = vector.shape_cast %15 : vector<1x1x1x8xf32> to vector<1x8xf32>
    %17 = vector.extract_strided_slice %14 {offsets = [0, 0], sizes = [8, 8], strides = [1, 1]} : vector<8x32xf32> to vector<8x8xf32>
    %c0_11 = arith.constant 0 : index
    %c0_12 = arith.constant 0 : index
    %18 = vector.load %arg9[%c0_11, %c0_12] : memref<8x64xf32, #tpu.memory_space<vmem>>, vector<8x8xf32>
    %c0_13 = arith.constant 0 : index
    %c32 = arith.constant 32 : index
    %19 = vector.load %arg9[%c0_13, %c32] : memref<8x64xf32, #tpu.memory_space<vmem>>, vector<8x8xf32>
    %cst_14 = arith.constant dense<0.000000e+00> : vector<8x8xf32>
    %20 = tpu.matmul %17, %18, %cst_14 {dimension_numbers = #tpu.dot_dimension_numbers<[1], [1], [0], [0], [0, 0, 1, 0], [], []>} : vector<8x8xf32>, vector<8x8xf32>, vector<8x8xf32> -> vector<8x8xf32>
    %21 = vector.broadcast %16 : vector<1x8xf32> to vector<8x8xf32>
    %22 = arith.addf %20, %21 : vector<8x8xf32>
    %cst_15 = arith.constant dense<0xFF800000> : vector<8xf32>
    %23 = vector.multi_reduction <maximumf>, %22, %cst_15 [1] : vector<8x8xf32> to vector<8xf32>
    %24 = vector.shape_cast %23 : vector<8xf32> to vector<8x1xf32>
    %25 = vector.broadcast %24 : vector<8x1xf32> to vector<8x8xf32>
    %26 = arith.subf %22, %25 : vector<8x8xf32>
    %27 = math.exp %26 : vector<8x8xf32>
    %cst_16 = arith.constant dense<0.000000e+00> : vector<8xf32>
    %28 = vector.multi_reduction <add>, %27, %cst_16 [1] : vector<8x8xf32> to vector<8xf32>
    %29 = vector.shape_cast %28 : vector<8xf32> to vector<8x1xf32>
    %30 = vector.broadcast %29 : vector<8x1xf32> to vector<8x8xf32>
    %31 = arith.divf %27, %30 : vector<8x8xf32>
    %c0_17 = arith.constant 0 : index
    %c0_18 = arith.constant 0 : index
    %c0_19 = arith.constant 0 : index
    %c0_20 = arith.constant 0 : index
    %32 = vector.load %arg8[%c0_17, %c0_18, %c0_19, %c0_20] : memref<1x4x8x8xf32, #tpu.memory_space<vmem>>, vector<1x1x8x8xf32>
    %33 = vector.shape_cast %32 : vector<1x1x8x8xf32> to vector<8x8xf32>
    %34 = vector.shape_cast %31 : vector<8x8xf32> to vector<1x1x8x8xf32>
    tpu.vector_store %arg8[%c0_17, %c0_18, %c0_19, %c0_20], %34 {strides = array<i32>} : memref<1x4x8x8xf32, #tpu.memory_space<vmem>>, vector<1x1x8x8xf32>,
    %cst_21 = arith.constant dense<0.000000e+00> : vector<8x8xf32>
    %35 = tpu.matmul %31, %19, %cst_21 {dimension_numbers = #tpu.dot_dimension_numbers<[1], [0], [0], [1], [0, 0, 1, 1], [], []>} : vector<8x8xf32>, vector<8x8xf32>, vector<8x8xf32> -> vector<8x8xf32>
    %36 = vector.extract_strided_slice %14 {offsets = [0, 8], sizes = [8, 8], strides = [1, 1]} : vector<8x32xf32> to vector<8x8xf32>
    %c0_22 = arith.constant 0 : index
    %c8 = arith.constant 8 : index
    %37 = vector.load %arg9[%c0_22, %c8] : memref<8x64xf32, #tpu.memory_space<vmem>>, vector<8x8xf32>
    %c0_23 = arith.constant 0 : index
    %c40 = arith.constant 40 : index
    %38 = vector.load %arg9[%c0_23, %c40] : memref<8x64xf32, #tpu.memory_space<vmem>>, vector<8x8xf32>
    %cst_24 = arith.constant dense<0.000000e+00> : vector<8x8xf32>
    %39 = tpu.matmul %36, %37, %cst_24 {dimension_numbers = #tpu.dot_dimension_numbers<[1], [1], [0], [0], [0, 0, 1, 0], [], []>} : vector<8x8xf32>, vector<8x8xf32>, vector<8x8xf32> -> vector<8x8xf32>
    %40 = vector.broadcast %16 : vector<1x8xf32> to vector<8x8xf32>
    %41 = arith.addf %39, %40 : vector<8x8xf32>
    %cst_25 = arith.constant dense<0xFF800000> : vector<8xf32>
    %42 = vector.multi_reduction <maximumf>, %41, %cst_25 [1] : vector<8x8xf32> to vector<8xf32>
    %43 = vector.shape_cast %42 : vector<8xf32> to vector<8x1xf32>
    %44 = vector.broadcast %43 : vector<8x1xf32> to vector<8x8xf32>
    %45 = arith.subf %41, %44 : vector<8x8xf32>
    %46 = math.exp %45 : vector<8x8xf32>
    %cst_26 = arith.constant dense<0.000000e+00> : vector<8xf32>
    %47 = vector.multi_reduction <add>, %46, %cst_26 [1] : vector<8x8xf32> to vector<8xf32>
    %48 = vector.shape_cast %47 : vector<8xf32> to vector<8x1xf32>
    %49 = vector.broadcast %48 : vector<8x1xf32> to vector<8x8xf32>
    %50 = arith.divf %46, %49 : vector<8x8xf32>
    %c0_27 = arith.constant 0 : index
    %c1 = arith.constant 1 : index
    %c0_28 = arith.constant 0 : index
    %c0_29 = arith.constant 0 : index
    %51 = vector.load %arg8[%c0_27, %c1, %c0_28, %c0_29] : memref<1x4x8x8xf32, #tpu.memory_space<vmem>>, vector<1x1x8x8xf32>
    %52 = vector.shape_cast %51 : vector<1x1x8x8xf32> to vector<8x8xf32>
    %53 = vector.shape_cast %50 : vector<8x8xf32> to vector<1x1x8x8xf32>
    tpu.vector_store %arg8[%c0_27, %c1, %c0_28, %c0_29], %53 {strides = array<i32>} : memref<1x4x8x8xf32, #tpu.memory_space<vmem>>, vector<1x1x8x8xf32>,
    %cst_30 = arith.constant dense<0.000000e+00> : vector<8x8xf32>
    %54 = tpu.matmul %50, %38, %cst_30 {dimension_numbers = #tpu.dot_dimension_numbers<[1], [0], [0], [1], [0, 0, 1, 1], [], []>} : vector<8x8xf32>, vector<8x8xf32>, vector<8x8xf32> -> vector<8x8xf32>
    %55 = vector.extract_strided_slice %14 {offsets = [0, 16], sizes = [8, 8], strides = [1, 1]} : vector<8x32xf32> to vector<8x8xf32>
    %c0_31 = arith.constant 0 : index
    %c16 = arith.constant 16 : index
    %56 = vector.load %arg9[%c0_31, %c16] : memref<8x64xf32, #tpu.memory_space<vmem>>, vector<8x8xf32>
    %c0_32 = arith.constant 0 : index
    %c48 = arith.constant 48 : index
    %57 = vector.load %arg9[%c0_32, %c48] : memref<8x64xf32, #tpu.memory_space<vmem>>, vector<8x8xf32>
    %cst_33 = arith.constant dense<0.000000e+00> : vector<8x8xf32>
    %58 = tpu.matmul %55, %56, %cst_33 {dimension_numbers = #tpu.dot_dimension_numbers<[1], [1], [0], [0], [0, 0, 1, 0], [], []>} : vector<8x8xf32>, vector<8x8xf32>, vector<8x8xf32> -> vector<8x8xf32>
    %59 = vector.broadcast %16 : vector<1x8xf32> to vector<8x8xf32>
    %60 = arith.addf %58, %59 : vector<8x8xf32>
    %cst_34 = arith.constant dense<0xFF800000> : vector<8xf32>
    %61 = vector.multi_reduction <maximumf>, %60, %cst_34 [1] : vector<8x8xf32> to vector<8xf32>
    %62 = vector.shape_cast %61 : vector<8xf32> to vector<8x1xf32>
    %63 = vector.broadcast %62 : vector<8x1xf32> to vector<8x8xf32>
    %64 = arith.subf %60, %63 : vector<8x8xf32>
    %65 = math.exp %64 : vector<8x8xf32>
    %cst_35 = arith.constant dense<0.000000e+00> : vector<8xf32>
    %66 = vector.multi_reduction <add>, %65, %cst_35 [1] : vector<8x8xf32> to vector<8xf32>
    %67 = vector.shape_cast %66 : vector<8xf32> to vector<8x1xf32>
    %68 = vector.broadcast %67 : vector<8x1xf32> to vector<8x8xf32>
    %69 = arith.divf %65, %68 : vector<8x8xf32>
    %c0_36 = arith.constant 0 : index
    %c2 = arith.constant 2 : index
    %c0_37 = arith.constant 0 : index
    %c0_38 = arith.constant 0 : index
    %70 = vector.load %arg8[%c0_36, %c2, %c0_37, %c0_38] : memref<1x4x8x8xf32, #tpu.memory_space<vmem>>, vector<1x1x8x8xf32>
    %71 = vector.shape_cast %70 : vector<1x1x8x8xf32> to vector<8x8xf32>
    %72 = vector.shape_cast %69 : vector<8x8xf32> to vector<1x1x8x8xf32>
    tpu.vector_store %arg8[%c0_36, %c2, %c0_37, %c0_38], %72 {strides = array<i32>} : memref<1x4x8x8xf32, #tpu.memory_space<vmem>>, vector<1x1x8x8xf32>,
    %cst_39 = arith.constant dense<0.000000e+00> : vector<8x8xf32>
    %73 = tpu.matmul %69, %57, %cst_39 {dimension_numbers = #tpu.dot_dimension_numbers<[1], [0], [0], [1], [0, 0, 1, 1], [], []>} : vector<8x8xf32>, vector<8x8xf32>, vector<8x8xf32> -> vector<8x8xf32>
    %74 = vector.extract_strided_slice %14 {offsets = [0, 24], sizes = [8, 8], strides = [1, 1]} : vector<8x32xf32> to vector<8x8xf32>
    %c0_40 = arith.constant 0 : index
    %c24 = arith.constant 24 : index
    %75 = vector.load %arg9[%c0_40, %c24] : memref<8x64xf32, #tpu.memory_space<vmem>>, vector<8x8xf32>
    %c0_41 = arith.constant 0 : index
    %c56 = arith.constant 56 : index
    %76 = vector.load %arg9[%c0_41, %c56] : memref<8x64xf32, #tpu.memory_space<vmem>>, vector<8x8xf32>
    %cst_42 = arith.constant dense<0.000000e+00> : vector<8x8xf32>
    %77 = tpu.matmul %74, %75, %cst_42 {dimension_numbers = #tpu.dot_dimension_numbers<[1], [1], [0], [0], [0, 0, 1, 0], [], []>} : vector<8x8xf32>, vector<8x8xf32>, vector<8x8xf32> -> vector<8x8xf32>
    %78 = vector.broadcast %16 : vector<1x8xf32> to vector<8x8xf32>
    %79 = arith.addf %77, %78 : vector<8x8xf32>
    %cst_43 = arith.constant dense<0xFF800000> : vector<8xf32>
    %80 = vector.multi_reduction <maximumf>, %79, %cst_43 [1] : vector<8x8xf32> to vector<8xf32>
    %81 = vector.shape_cast %80 : vector<8xf32> to vector<8x1xf32>
    %82 = vector.broadcast %81 : vector<8x1xf32> to vector<8x8xf32>
    %83 = arith.subf %79, %82 : vector<8x8xf32>
    %84 = math.exp %83 : vector<8x8xf32>
    %cst_44 = arith.constant dense<0.000000e+00> : vector<8xf32>
    %85 = vector.multi_reduction <add>, %84, %cst_44 [1] : vector<8x8xf32> to vector<8xf32>
    %86 = vector.shape_cast %85 : vector<8xf32> to vector<8x1xf32>
    %87 = vector.broadcast %86 : vector<8x1xf32> to vector<8x8xf32>
    %88 = arith.divf %84, %87 : vector<8x8xf32>
    %c0_45 = arith.constant 0 : index
    %c3 = arith.constant 3 : index
    %c0_46 = arith.constant 0 : index
    %c0_47 = arith.constant 0 : index
    %89 = vector.load %arg8[%c0_45, %c3, %c0_46, %c0_47] : memref<1x4x8x8xf32, #tpu.memory_space<vmem>>, vector<1x1x8x8xf32>
    %90 = vector.shape_cast %89 : vector<1x1x8x8xf32> to vector<8x8xf32>
    %91 = vector.shape_cast %88 : vector<8x8xf32> to vector<1x1x8x8xf32>
    tpu.vector_store %arg8[%c0_45, %c3, %c0_46, %c0_47], %91 {strides = array<i32>} : memref<1x4x8x8xf32, #tpu.memory_space<vmem>>, vector<1x1x8x8xf32>,
    %cst_48 = arith.constant dense<0.000000e+00> : vector<8x8xf32>
    %92 = tpu.matmul %88, %76, %cst_48 {dimension_numbers = #tpu.dot_dimension_numbers<[1], [0], [0], [1], [0, 0, 1, 1], [], []>} : vector<8x8xf32>, vector<8x8xf32>, vector<8x8xf32> -> vector<8x8xf32>
    %93 = tpu.concatenate %35, %54, %73, %92 in 1 : vector<8x8xf32>, vector<8x8xf32>, vector<8x8xf32>, vector<8x8xf32> -> vector<8x32xf32>
    %c0_49 = arith.constant 0 : index
    %c0_50 = arith.constant 0 : index
    %c0_51 = arith.constant 0 : index
    %94 = vector.load %arg7[%c0_49, %c0_50, %c0_51] : memref<1x8x32xf32, #tpu.memory_space<vmem>>, vector<1x8x32xf32>
    %95 = vector.shape_cast %94 : vector<1x8x32xf32> to vector<8x32xf32>
    %96 = vector.shape_cast %93 : vector<8x32xf32> to vector<1x8x32xf32>
    tpu.vector_store %arg7[%c0_49, %c0_50, %c0_51], %96 {strides = array<i32>} : memref<1x8x32xf32, #tpu.memory_space<vmem>>, vector<1x8x32xf32>,
    return
  }
  func.func @transform_0(%arg0: i32, %arg1: i32, %arg2: i32) -> (i32, i32, i32) {
    %c0_i32 = arith.constant 0 : i32
    %c0_i32_0 = arith.constant 0 : i32
    %c0_i32_1 = arith.constant 0 : i32
    return %arg0, %c0_i32, %c0_i32_0 : i32, i32, i32
  }
  func.func @transform_1(%arg0: i32, %arg1: i32, %arg2: i32) -> (i32, i32, i32, i32) {
    %c0_i32 = arith.constant 0 : i32
    %c0_i32_0 = arith.constant 0 : i32
    %c0_i32_1 = arith.constant 0 : i32
    %c0_i32_2 = arith.constant 0 : i32
    return %arg0, %c0_i32, %c0_i32_0, %c0_i32_1 : i32, i32, i32, i32
  }
  func.func @transform_2(%arg0: i32, %arg1: i32, %arg2: i32) -> (i32, i32) {
    %c0_i32 = arith.constant 0 : i32
    %c0_i32_0 = arith.constant 0 : i32
    return %c0_i32, %arg1 : i32, i32
  }
  func.func @transform_3(%arg0: i32, %arg1: i32, %arg2: i32) -> (i32, i32) {
    %c0_i32 = arith.constant 0 : i32
    %c0_i32_0 = arith.constant 0 : i32
    return %c0_i32, %arg1 : i32, i32
  }
  func.func @transform_4(%arg0: i32, %arg1: i32, %arg2: i32) -> (i32, i32, i32) {
    %c0_i32 = arith.constant 0 : i32
    return %arg0, %arg2, %arg1 : i32, i32, i32
  }
  func.func @transform_5(%arg0: i32, %arg1: i32, %arg2: i32) -> (i32, i32, i32, i32) {
    %c0_i32 = arith.constant 0 : i32
    %c0_i32_0 = arith.constant 0 : i32
    return %arg0, %arg1, %arg2, %c0_i32 : i32, i32, i32, i32
  }
}

</mosaic_0001>

<llo_original>
// kernel: tpu_custom_call.1
$region0: #{tpu_custom_call.1}
  #allocation0 [shape = 'u32[]', space=smem, size = 0x4, offset = 0x4, fixed_abs, tag = 'smem constant byte address 0x4 - core index']
  #allocation1 [shape = 'u32[144,128]{1,0:T(1,128)}', space=vmem, size = 0x12000, scoped, tag = 'internal scratch']
  #allocation2 [shape = 'f32[8,64]{1,0:T(8,128)}', space=vmem, size = 0x1000, scoped, tag = 'scratch operand']
  %s0 = inlined_call_operand.hbm [shape: f32[2,8,32], index: 0, kind: input, shape index: {}]
  %s1 = inlined_call_operand.vmem [shape: f32[2,1,1,8], index: 1, kind: input, shape index: {}]
  %s2 = inlined_call_operand.hbm [shape: f32[32,96], index: 2, kind: input, shape index: {}]
  %s3 = inlined_call_operand.vmem [shape: f32[1,96], index: 3, kind: input, shape index: {}]
  %s4 = inlined_call_operand.hbm [shape: f32[2,8,32], index: 4, kind: output, shape index: {0}]
  %s5 = inlined_call_operand.hbm [shape: f32[2,4,8,8], index: 5, kind: output, shape index: {1}]
  %6 = xla_tuple %s4, %s5
  %s7 = sld [smem:[#allocation0]]
  $region69: #{tpu_custom_call.1} parent=0
    _
  %s9 = ssub.s32 1, %s7
  %s10 = scalar_select 0, %s9, %s7
  $region1: #{tpu_custom_call.1} parent=0
    #allocation3 [shape = 'u8[8192]{0}', space=vmem, size = 0x2000, scoped, tag = 'input window, operand 0']
    #allocation4 [shape = 's32[2]{0}', space=sflag, size = 0x8, scoped, tag = 'scoped memory for tpu_custom_call.1']
    #allocation5 [shape = 's32[2]{0}', space=sflag, size = 0x8, scoped, tag = 'scoped memory for tpu_custom_call.1']
    #allocation6 [shape = 'u8[16384]{0}', space=vmem, size = 0x4000, scoped, tag = 'input window, operand 2, single buffered']
    #allocation7 [shape = 's32[1]{0}', space=sflag, size = 0x4, scoped, tag = 'scoped memory for tpu_custom_call.1']
    #allocation8 [shape = 'u8[8192]{0}', space=vmem, size = 0x2000, scoped, tag = 'output window, operand 0']
    #allocation9 [shape = 'u8[32768]{0}', space=vmem, size = 0x8000, scoped, tag = 'output window, operand 1']
    #allocation10 [shape = 's32[2]{0}', space=sflag, size = 0x8, scoped, tag = 'scoped memory for tpu_custom_call.1']
    %11 = vsyncpa [#allocation4], 0
    %s12 = scalar_lea.sflag [#allocation4], 1
    %13 = vsyncpa %s12, 0
    %14 = vsyncpa [#allocation7], 0
    %15 = vsyncpa [#allocation5], 0
    %s16 = scalar_lea.sflag [#allocation5], 1
    %17 = vsyncpa %s16, 0
    %18 = vsyncpa [#allocation10], 0
    %s19 = scalar_lea.sflag [#allocation10], 1
    %20 = vsyncpa %s19, 0
    loop: start=0, step=1, limit=4
    $region2: #{tpu_custom_call.1} parent=1 // loop_pre_header
      _
    $region3: #{tpu_custom_call.1} parent=1 // loop_header
      %s22 = sphi 0, %s26
      %p23 = scmp.ge.s32.totalorder %s22, 4
      %s29 = sphi 0, %s48
      %s30 = sphi 0, %s44
      %s31 = sphi 0, %s40
      %s32 = sphi 0, %s29
      %s33 = sphi 0, %s30
      %s34 = sphi 0, %s31
      %s35 = sphi 0, %s32
      %s36 = sphi 0, %s33
      %s37 = sphi 0, %s34
      %s51 = sphi 0, %s53
      %s54 = sphi 0, %s51
      %s55 = sphi 0, %s54
      %s71 = sphi 0, %s55
      %s77 = sphi 0, %s79
      %s80 = sphi 0, %s77
      %s81 = sphi 0, %s80
      %s97 = sphi 0, %s81
      %s103 = sphi 0, %s105
      %s106 = sphi 0, %s103
      %s107 = sphi 0, %s106
      %s123 = sphi 0, %s107
      %s129 = sphi 0, %s131
      %s132 = sphi 0, %s129
      %s133 = sphi 0, %s132
      %s149 = sphi 0, %s133
      %s159 = sphi 0, %s161
      %s162 = sphi 0, %s159
      %s163 = sphi 0, %s162
      %s179 = sphi 0, %s163
      %s189 = sphi 0, %s191
      %s192 = sphi 0, %s189
      %s193 = sphi 0, %s192
      %s209 = sphi 0, %s193
    $region4: #{tpu_custom_call.1} parent=1 // loop_header_branch
      %25 = sbr.rel (%p23) target = $region8
    $region5: #{tpu_custom_call.1} parent=1 // loop_body
      %s27 = ssub.s32 %s22, 1
      %s28 = ssub.s32 %s22, 2
      %s38 = sadd.s32 1, %s31
      %p39 = scmp.ge.s32.totalorder %s38, 1
      %s40 = scalar_select %p39, 0, %s38
      %s41 = sadd.s32 1, %s30
      %s42 = scalar_select %p39, %s41, %s30
      %p43 = scmp.ge.s32.totalorder %s42, 1
      %s44 = scalar_select %p43, 0, %s42
      %s45 = sadd.s32 1, %s29
      %s46 = scalar_select %p43, %s45, %s29
      %p47 = scmp.ge.s32.totalorder %s46, 2
      %s48 = scalar_select %p47, 0, %s46
      %s49 = ssub.s32 %s29, %s48
      %p50 = scmp.eq.s32.totalorder %s49, 0
      %s52 = sadd.s32 %s51, 1
      %s53 = scalar_select %p50, %s51, %s52
      %p56 = pneg %p50
      %p57 = scmp.eq.s32.totalorder %s22, 1
      %p58 = por %p56, %p57
      %p59 = scmp.ne.s32.totalorder %s51, %s54
      %p60 = scmp.eq.s32.totalorder %s22, 0
      %p61 = por %p59, %p60
      %p62 = scmp.ne.s32.totalorder %s51, %s54
      %p63 = scmp.eq.s32.totalorder %s27, 1
      %p64 = por %p62, %p63
      %p65 = scmp.ne.s32.totalorder %s54, %s55
      %p66 = scmp.eq.s32.totalorder %s27, 0
      %p67 = por %p65, %p66
      %p68 = scmp.ne.s32.totalorder %s54, %s55
      %p69 = scmp.eq.s32.totalorder %s28, 1
      %p70 = por %p68, %p69
      %p72 = scmp.ne.s32.totalorder %s55, %s71
      %p73 = scmp.eq.s32.totalorder %s28, 0
      %p74 = por %p72, %p73
      %s75 = ssub.s32 %s29, %s48
      %p76 = scmp.eq.s32.totalorder %s75, 0
      %s78 = sadd.s32 %s77, 1
      %s79 = scalar_select %p76, %s77, %s78
      %p82 = pneg %p76
      %p83 = scmp.eq.s32.totalorder %s22, 1
      %p84 = por %p82, %p83
      %p85 = scmp.ne.s32.totalorder %s77, %s80
      %p86 = scmp.eq.s32.totalorder %s22, 0
      %p87 = por %p85, %p86
      %p88 = scmp.ne.s32.totalorder %s77, %s80
      %p89 = scmp.eq.s32.totalorder %s27, 1
      %p90 = por %p88, %p89
      %p91 = scmp.ne.s32.totalorder %s80, %s81
      %p92 = scmp.eq.s32.totalorder %s27, 0
      %p93 = por %p91, %p92
      %p94 = scmp.ne.s32.totalorder %s80, %s81
      %p95 = scmp.eq.s32.totalorder %s28, 1
      %p96 = por %p94, %p95
      %p98 = scmp.ne.s32.totalorder %s81, %s97
      %p99 = scmp.eq.s32.totalorder %s28, 0
      %p100 = por %p98, %p99
      %s101 = ssub.s32 %s30, %s44
      %p102 = scmp.eq.s32.totalorder %s101, 0
      %s104 = sadd.s32 %s103, 1
      %s105 = scalar_select %p102, %s103, %s104
      %p108 = pneg %p102
      %p109 = scmp.eq.s32.totalorder %s22, 1
      %p110 = por %p108, %p109
      %p111 = scmp.ne.s32.totalorder %s103, %s106
      %p112 = scmp.eq.s32.totalorder %s22, 0
      %p113 = por %p111, %p112
      %p114 = scmp.ne.s32.totalorder %s103, %s106
      %p115 = scmp.eq.s32.totalorder %s27, 1
      %p116 = por %p114, %p115
      %p117 = scmp.ne.s32.totalorder %s106, %s107
      %p118 = scmp.eq.s32.totalorder %s27, 0
      %p119 = por %p117, %p118
      %p120 = scmp.ne.s32.totalorder %s106, %s107
      %p121 = scmp.eq.s32.totalorder %s28, 1
      %p122 = por %p120, %p121
      %p124 = scmp.ne.s32.totalorder %s107, %s123
      %p125 = scmp.eq.s32.totalorder %s28, 0
      %p126 = por %p124, %p125
      %s127 = ssub.s32 %s30, %s44
      %p128 = scmp.eq.s32.totalorder %s127, 0
      %s130 = sadd.s32 %s129, 1
      %s131 = scalar_select %p128, %s129, %s130
      %p134 = pneg %p128
      %p135 = scmp.eq.s32.totalorder %s22, 1
      %p136 = por %p134, %p135
      %p137 = scmp.ne.s32.totalorder %s129, %s132
      %p138 = scmp.eq.s32.totalorder %s22, 0
      %p139 = por %p137, %p138
      %p140 = scmp.ne.s32.totalorder %s129, %s132
      %p141 = scmp.eq.s32.totalorder %s27, 1
      %p142 = por %p140, %p141
      %p143 = scmp.ne.s32.totalorder %s132, %s133
      %p144 = scmp.eq.s32.totalorder %s27, 0
      %p145 = por %p143, %p144
      %p146 = scmp.ne.s32.totalorder %s132, %s133
      %p147 = scmp.eq.s32.totalorder %s28, 1
      %p148 = por %p146, %p147
      %p150 = scmp.ne.s32.totalorder %s133, %s149
      %p151 = scmp.eq.s32.totalorder %s28, 0
      %p152 = por %p150, %p151
      %s153 = ssub.s32 %s29, %s48
      %s154 = ssub.s32 %s31, %s40
      %s155 = sor.u32 %s153, %s154
      %s156 = ssub.s32 %s30, %s44
      %s157 = sor.u32 %s155, %s156
      %p158 = scmp.eq.s32.totalorder %s157, 0
      %s160 = sadd.s32 %s159, 1
      %s161 = scalar_select %p158, %s159, %s160
      %p164 = pneg %p158
      %p165 = scmp.eq.s32.totalorder %s22, 1
      %p166 = por %p164, %p165
      %p167 = scmp.ne.s32.totalorder %s159, %s162
      %p168 = scmp.eq.s32.totalorder %s22, 0
      %p169 = por %p167, %p168
      %p170 = scmp.ne.s32.totalorder %s159, %s162
      %p171 = scmp.eq.s32.totalorder %s27, 1
      %p172 = por %p170, %p171
      %p173 = scmp.ne.s32.totalorder %s162, %s163
      %p174 = scmp.eq.s32.totalorder %s27, 0
      %p175 = por %p173, %p174
      %p176 = scmp.ne.s32.totalorder %s162, %s163
      %p177 = scmp.eq.s32.totalorder %s28, 1
      %p178 = por %p176, %p177
      %p180 = scmp.ne.s32.totalorder %s163, %s179
      %p181 = scmp.eq.s32.totalorder %s28, 0
      %p182 = por %p180, %p181
      %s183 = ssub.s32 %s29, %s48
      %s184 = ssub.s32 %s30, %s44
      %s185 = sor.u32 %s183, %s184
      %s186 = ssub.s32 %s31, %s40
      %s187 = sor.u32 %s185, %s186
      %p188 = scmp.eq.s32.totalorder %s187, 0
      %s190 = sadd.s32 %s189, 1
      %s191 = scalar_select %p188, %s189, %s190
      %p194 = pneg %p188
      %p195 = scmp.eq.s32.totalorder %s22, 1
      %p196 = por %p194, %p195
      %p197 = scmp.ne.s32.totalorder %s189, %s192
      %p198 = scmp.eq.s32.totalorder %s22, 0
      %p199 = por %p197, %p198
      %p200 = scmp.ne.s32.totalorder %s189, %s192
      %p201 = scmp.eq.s32.totalorder %s27, 1
      %p202 = por %p200, %p201
      %p203 = scmp.ne.s32.totalorder %s192, %s193
      %p204 = scmp.eq.s32.totalorder %s27, 0
      %p205 = por %p203, %p204
      %p206 = scmp.ne.s32.totalorder %s192, %s193
      %p207 = scmp.eq.s32.totalorder %s28, 1
      %p208 = por %p206, %p207
      %p210 = scmp.ne.s32.totalorder %s193, %s209
      %p211 = scmp.eq.s32.totalorder %s28, 0
      %p212 = por %p210, %p211
      %p213 = scmp.le.s32.totalorder 1, %s22
      %p214 = scmp.lt.s32.totalorder %s22, 3
      %p215 = pnand %p213, %p214
      %p216 = pneg %p215
      // Predicated region
      $region9: #{tpu_custom_call.1} parent=5 // pred_check
        _
      $region10: #{tpu_custom_call.1} parent=5 // pred_check_branch
        %218 = sbr.rel (%p215) target = $region12
      $region11: #{tpu_custom_call.1} parent=5 // pred_region
        %s219 = ssub.s32 %s22, 1
        // Predicated region
        $region13: #{tpu_custom_call.1} parent=11 // pred_check
          %p220 = pneg %p119
        $region14: #{tpu_custom_call.1} parent=11 // pred_check_branch
          %222 = sbr.rel (%p220) target = $region16
        $region15: #{tpu_custom_call.1} parent=11 // pred_region
          %s224 = ssub.s32 512, 512
          %225 = vsyncadd [#allocation7], %s224
          %s226 = smul.addr %s33, 128
          %s227 = scalar_lea.hbm %s2, %s226
          %s228 = sshll.u32 [#allocation6], 4
          %s229 = int_to_ptr.vmem [resolvable:$true] %s228
          %234 = dma.hbm_to_vmem [thread:$0]  %s227, 512, %s229, [#allocation7], 128, 128, 8
        $region16: #{tpu_custom_call.1} parent=11 // pred_fallthru
          _
        // Predicated region
        $region17: #{tpu_custom_call.1} parent=11 // pred_check
          %p235 = pneg %p145
        $region18: #{tpu_custom_call.1} parent=11 // pred_check_branch
          %237 = sbr.rel (%p235) target = $region20
        $region19: #{tpu_custom_call.1} parent=11 // pred_region
          %p238 = scmp.lt.s32.totalorder %s33, 0
          %s239 = scalar_select %p238, %s33, 0
          %s240 = scalar_lea.vmem %s3, %s239
        $region20: #{tpu_custom_call.1} parent=11 // pred_fallthru
          _
      $region12: #{tpu_custom_call.1} parent=5 // pred_fallthru
        _
      %p241 = scmp.lt.s32.totalorder %s22, 2
      // Predicated region
      $region21: #{tpu_custom_call.1} parent=5 // pred_check
        %p242 = pneg %p241
      $region22: #{tpu_custom_call.1} parent=5 // pred_check_branch
        %244 = sbr.rel (%p242) target = $region24
      $region23: #{tpu_custom_call.1} parent=5 // pred_region
        // Predicated region
        $region25: #{tpu_custom_call.1} parent=23 // pred_check
          %p245 = pneg %p61
        $region26: #{tpu_custom_call.1} parent=23 // pred_check_branch
          %247 = sbr.rel (%p245) target = $region28
        $region27: #{tpu_custom_call.1} parent=23 // pred_region
          %s248 = sand.u32 %s51, 1
          %s249 = scalar_lea.sflag [#allocation4], %s248
          %s250 = sand.u32 %s51, 1
          %s251 = smul.addr %s250, 8
          %s252 = scalar_lea.vmem [#allocation3], %s251
          %s254 = ssub.s32 128, 128
          %255 = vsyncadd %s249, %s254
          %s256 = smul.addr %s29, 128
          %s257 = scalar_lea.hbm %s0, %s256
          %s259 = sshll.u32 %s252, 4
          %s260 = int_to_ptr.vmem [resolvable:$true] %s259
          %262 = dma.hbm_to_vmem [thread:$0]  %s257, 128, %s260, %s249
        $region28: #{tpu_custom_call.1} parent=23 // pred_fallthru
          _
        // Predicated region
        $region29: #{tpu_custom_call.1} parent=23 // pred_check
          %p263 = pneg %p87
        $region30: #{tpu_custom_call.1} parent=23 // pred_check_branch
          %265 = sbr.rel (%p263) target = $region32
        $region31: #{tpu_custom_call.1} parent=23 // pred_region
          %p266 = scmp.lt.s32.totalorder %s29, 1
          %s267 = scalar_select %p266, %s29, 1
          %s268 = scalar_lea.vmem %s1, %s267
        $region32: #{tpu_custom_call.1} parent=23 // pred_fallthru
          _
      $region24: #{tpu_custom_call.1} parent=5 // pred_fallthru
        _
      %p269 = scmp.le.s32.totalorder 1, %s22
      %p270 = scmp.lt.s32.totalorder %s22, 3
      %p271 = pnand %p269, %p270
      %p272 = pneg %p271
      // Predicated region
      $region33: #{tpu_custom_call.1} parent=5 // pred_check
        _
      $region34: #{tpu_custom_call.1} parent=5 // pred_check_branch
        %274 = sbr.rel (%p271) target = $region36
      $region35: #{tpu_custom_call.1} parent=5 // pred_region
        %s275 = ssub.s32 %s22, 1
        %s276 = sand.u32 %s54, 1
        %s277 = scalar_lea.sflag [#allocation4], %s276
        %s278 = sand.u32 %s54, 1
        %s279 = smul.addr %s278, 8
        %s280 = scalar_lea.vmem [#allocation3], %s279
        // Predicated region
        $region37: #{tpu_custom_call.1} parent=35 // pred_check
          %p281 = pneg %p67
        $region38: #{tpu_custom_call.1} parent=35 // pred_check_branch
          %283 = sbr.rel (%p281) target = $region40
        $region39: #{tpu_custom_call.1} parent=35 // pred_region
          %284 = dma.done %s277, 128
        $region40: #{tpu_custom_call.1} parent=35 // pred_fallthru
          _
        // Predicated region
        $region41: #{tpu_custom_call.1} parent=35 // pred_check
          %p285 = pneg %p119
        $region42: #{tpu_custom_call.1} parent=35 // pred_check_branch
          %287 = sbr.rel (%p285) target = $region44
        $region43: #{tpu_custom_call.1} parent=35 // pred_region
          %288 = dma.done [#allocation7], 512
        $region44: #{tpu_custom_call.1} parent=35 // pred_fallthru
          _
        %s289 = sand.u32 %s54, 1
        %s290 = scalar_lea.sflag [#allocation4], %s289
        %s291 = sand.u32 %s54, 1
        %s292 = smul.addr %s291, 8
        %s293 = scalar_lea.vmem [#allocation3], %s292
        %p294 = pneg %p67
        %p295 = pneg %p64
        %p296 = scmp.lt.s32.totalorder %s32, 1
        %s297 = scalar_select %p296, %s32, 1
        %s298 = scalar_lea.vmem %s1, %s297
        %p299 = pneg %p93
        %p300 = pneg %p90
        %p301 = pneg %p119
        %p302 = pneg %p116
        %p303 = scmp.lt.s32.totalorder %s33, 0
        %s304 = scalar_select %p303, %s33, 0
        %s305 = scalar_lea.vmem %s3, %s304
        %p306 = pneg %p145
        %p307 = pneg %p142
        %p308 = pneg %p175
        %p309 = pneg %p172
        %s310 = sand.u32 %s162, 1
        %s311 = scalar_lea.sflag [#allocation5], %s310
        %s312 = sand.u32 %s162, 1
        %s313 = smul.addr %s312, 8
        %s314 = scalar_lea.vmem [#allocation8], %s313
        %p315 = pneg %p205
        %p316 = pneg %p202
        %s317 = sand.u32 %s192, 1
        %s318 = scalar_lea.sflag [#allocation10], %s317
        %s319 = sand.u32 %s192, 1
        %s320 = smul.addr %s319, 32
        %s321 = scalar_lea.vmem [#allocation9], %s320
        %p322 = scmp.lt.s32.totalorder %s32, 1
        %s323 = scalar_select %p322, %s32, 1
        %s324 = scalar_lea.vmem %s1, %s323
        %p325 = scmp.lt.s32.totalorder %s33, 0
        %s326 = scalar_select %p325, %s33, 0
        %s327 = scalar_lea.vmem %s3, %s326
        %s328 = smul.u32 4, %s33
        %p329 = scmp.eq.s32.totalorder %s34, 0
        // Predicated region
        $region45: #{tpu_custom_call.1} parent=35 // pred_check
          %p330 = pneg %p329
        $region46: #{tpu_custom_call.1} parent=35 // pred_check_branch
          %332 = sbr.rel (%p330) target = $region48
        $region47: #{tpu_custom_call.1} parent=35 // pred_region
          %v333 = vld [vmem:[%s280] sm:$0xff]
          %v334 = vld [vmem:[#allocation6] sm:$0xff]
          %v335 = vld [vmem:[#allocation6 + $0x8] sm:$0xff]
          %v336 = vld [vmem:[#allocation6 + $0x10] sm:$0xff]
          %v337 = vld [vmem:[#allocation6 + $0x18] sm:$0xff]
          %v338 = vld [vmem:[%s327] sm:$0x1]
          %v340 = vlaneseq
          %v341 = vshrl.u32 %v340, 7
          %v342 = vsub.s32 0, %v341
          %v343 = vrot.slane %v338, %v342
          %348 = vrot.lane.b32.xlu0 %v334, 96
          %v349 = vpop.permute.xlu0 %348
          %350 = vrot.lane.b32.xlu0 %v335, 96
          %v351 = vpop.permute.xlu0 %350
          %352 = vrot.lane.b32.xlu0 %v336, 96
          %v353 = vpop.permute.xlu0 %352
          %354 = vrot.lane.b32.xlu0 %v337, 96
          %v355 = vpop.permute.xlu0 %354
          %360 = vrot.lane.b32.xlu0 %v343, 96
          %v361 = vpop.permute.xlu0 %360
          %vm363 = vcmask 261120
          %v365 = vsel %vm363, %v333, 0
          %367 = vmatprep.subr.mxu0 0.0
          %368 = vmatpush1.msra.mxu0 %v349
          %369 = vmatprep.subr.mxu0 0.0
          %370 = vmatpush1.msra.mxu0 %v351
          %371 = vmatprep.subr.mxu0 0.0
          %372 = vmatpush1.msra.mxu0 %v353
          %373 = vmatprep.subr.mxu0 0.0
          %374 = vmatpush1.msra.mxu0 %v355
          %375 = vmatprep.subr.mxu0 0.0
          %376 = vmatpush1.msra.mxu0 0.0
          %377 = vmatprep.subr.mxu0 0.0
          %378 = vmatpush1.msra.mxu0 0.0
          %379 = vmatprep.subr.mxu0 0.0
          %380 = vmatpush1.msra.mxu0 0.0
          %381 = vmatprep.subr.mxu0 0.0
          %382 = vmatpush1.msra.mxu0 0.0
          %383 = vmatprep.subr.mxu0 0.0
          %384 = vmatpush1.msra.mxu0 0.0
          %385 = vmatprep.subr.mxu0 0.0
          %386 = vmatpush1.msra.mxu0 0.0
          %387 = vmatprep.subr.mxu0 0.0
          %388 = vmatpush1.msra.mxu0 0.0
          %389 = vmatprep.subr.mxu0 0.0
          %390 = vmatpush1.msra.mxu0 0.0
          %391 = vmatprep.subr.mxu0 0.0
          %392 = vmatpush1.msra.mxu0 0.0
          %393 = vmatprep.subr.mxu0 0.0
          %394 = vmatpush1.msra.mxu0 0.0
          %395 = vmatprep.subr.mxu0 0.0
          %396 = vmatpush1.msra.mxu0 0.0
          %397 = vmatprep.subr.mxu0 0.0
          %398 = vmatpush1.msra.mxu0 0.0
          %399 = vmatprep.subr.mxu0 0.0
          %400 = vmatpush1.msra.mxu0 0.0
          %401 = vmatprep.subr.mxu0 0.0
          %402 = vmatpush1.msra.mxu0 0.0
          %403 = vmatprep.subr.mxu0 0.0
          %404 = vmatpush1.msra.mxu0 0.0
          %405 = vmatprep.subr.mxu0 0.0
          %406 = vmatpush1.msra.mxu0 0.0
          %407 = vmatprep.subr.mxu0 0.0
          %408 = vmatpush1.msra.mxu0 0.0
          %409 = vmatprep.subr.mxu0 0.0
          %410 = vmatpush1.msra.mxu0 0.0
          %411 = vmatprep.subr.mxu0 0.0
          %412 = vmatpush1.msra.mxu0 0.0
          %413 = vmatprep.subr.mxu0 0.0
          %414 = vmatpush1.msra.mxu0 0.0
          %415 = vmatprep.subr.mxu0 0.0
          %416 = vmatpush1.msra.mxu0 0.0
          %417 = vmatprep.subr.mxu0 0.0
          %418 = vmatpush1.msra.mxu0 0.0
          %419 = vmatprep.subr.mxu0 0.0
          %420 = vmatpush1.msra.mxu0 0.0
          %421 = vmatprep.subr.mxu0 0.0
          %422 = vmatpush1.msra.mxu0 0.0
          %423 = vmatprep.subr.mxu0 0.0
          %424 = vmatpush1.msra.mxu0 0.0
          %425 = vmatprep.subr.mxu0 0.0
          %426 = vmatpush1.msra.mxu0 0.0
          %427 = vmatprep.subr.mxu0 0.0
          %428 = vmatpush1.msra.mxu0 0.0
          %429 = vmatprep.subr.mxu0 0.0
          %430 = vmatpush1.msra.mxu0 0.0
          %431 = vmatprep.mubr.f32.mxu0 0.0
          %432 = vmatmul.mubr.f32.gmra.mrb[0].mxu0 %v365
          %v433 = vpop.f32.mrb[0].mxu0
          %v434 = vadd.f32 %v361, %v433
          %v435 = vpop.f32.mrb[0].mxu0
          %436 = vdwg.mxu0
          %vm437 = vcmask 523264
          %438 = vst.msk [vmem:[#allocation2] sm:$0xff] %vm437, %v434
        $region48: #{tpu_custom_call.1} parent=35 // pred_fallthru
          _
        %s439 = smul.u32 %s34, 8
        %s440 = scalar_lea.vmem %s280, %s439 [#allocation3]
        %v441 = vld [vmem:[%s440] sm:$0xff]
        %v442 = vld [vmem:[#allocation6] sm:$0xff]
        %v443 = vld [vmem:[#allocation6 + $0x8] sm:$0xff]
        %v444 = vld [vmem:[#allocation6 + $0x10] sm:$0xff]
        %v445 = vld [vmem:[#allocation6 + $0x18] sm:$0xff]
        %v446 = vld [vmem:[%s327] sm:$0x1]
        %v448 = vlaneseq
        %v449 = vshrl.u32 %v448, 7
        %v450 = vsub.s32 0, %v449
        %v451 = vrot.slane %v446, %v450
        %vm453 = vcmask 261120
        %v455 = vsel %vm453, %v441, 0
        %457 = vmatprep.subr.mxu0 0.0
        %458 = vmatpush1.msra.mxu0 %v442
        %459 = vmatprep.subr.mxu0 0.0
        %460 = vmatpush1.msra.mxu0 %v443
        %461 = vmatprep.subr.mxu0 0.0
        %462 = vmatpush1.msra.mxu0 %v444
        %463 = vmatprep.subr.mxu0 0.0
        %464 = vmatpush1.msra.mxu0 %v445
        %465 = vmatprep.subr.mxu0 0.0
        %466 = vmatpush1.msra.mxu0 0.0
        %467 = vmatprep.subr.mxu0 0.0
        %468 = vmatpush1.msra.mxu0 0.0
        %469 = vmatprep.subr.mxu0 0.0
        %470 = vmatpush1.msra.mxu0 0.0
        %471 = vmatprep.subr.mxu0 0.0
        %472 = vmatpush1.msra.mxu0 0.0
        %473 = vmatprep.subr.mxu0 0.0
        %474 = vmatpush1.msra.mxu0 0.0
        %475 = vmatprep.subr.mxu0 0.0
        %476 = vmatpush1.msra.mxu0 0.0
        %477 = vmatprep.subr.mxu0 0.0
        %478 = vmatpush1.msra.mxu0 0.0
        %479 = vmatprep.subr.mxu0 0.0
        %480 = vmatpush1.msra.mxu0 0.0
        %481 = vmatprep.subr.mxu0 0.0
        %482 = vmatpush1.msra.mxu0 0.0
        %483 = vmatprep.subr.mxu0 0.0
        %484 = vmatpush1.msra.mxu0 0.0
        %485 = vmatprep.subr.mxu0 0.0
        %486 = vmatpush1.msra.mxu0 0.0
        %487 = vmatprep.subr.mxu0 0.0
        %488 = vmatpush1.msra.mxu0 0.0
        %489 = vmatprep.subr.mxu0 0.0
        %490 = vmatpush1.msra.mxu0 0.0
        %491 = vmatprep.subr.mxu0 0.0
        %492 = vmatpush1.msra.mxu0 0.0
        %493 = vmatprep.subr.mxu0 0.0
        %494 = vmatpush1.msra.mxu0 0.0
        %495 = vmatprep.subr.mxu0 0.0
        %496 = vmatpush1.msra.mxu0 0.0
        %497 = vmatprep.subr.mxu0 0.0
        %498 = vmatpush1.msra.mxu0 0.0
        %499 = vmatprep.subr.mxu0 0.0
        %500 = vmatpush1.msra.mxu0 0.0
        %501 = vmatprep.subr.mxu0 0.0
        %502 = vmatpush1.msra.mxu0 0.0
        %503 = vmatprep.subr.mxu0 0.0
        %504 = vmatpush1.msra.mxu0 0.0
        %505 = vmatprep.subr.mxu0 0.0
        %506 = vmatpush1.msra.mxu0 0.0
        %507 = vmatprep.subr.mxu0 0.0
        %508 = vmatpush1.msra.mxu0 0.0
        %509 = vmatprep.subr.mxu0 0.0
        %510 = vmatpush1.msra.mxu0 0.0
        %511 = vmatprep.subr.mxu0 0.0
        %512 = vmatpush1.msra.mxu0 0.0
        %513 = vmatprep.subr.mxu0 0.0
        %514 = vmatpush1.msra.mxu0 0.0
        %515 = vmatprep.subr.mxu0 0.0
        %516 = vmatpush1.msra.mxu0 0.0
        %517 = vmatprep.subr.mxu0 0.0
        %518 = vmatpush1.msra.mxu0 0.0
        %519 = vmatprep.subr.mxu0 0.0
        %520 = vmatpush1.msra.mxu0 0.0
        %521 = vmatprep.mubr.f32.mxu0 0.0
        %522 = vmatmul.mubr.f32.gmra.mrb[0].mxu0 %v455
        %v523 = vpop.f32.mrb[0].mxu0
        %v524 = vadd.f32 %v451, %v523
        %v525 = vpop.f32.mrb[0].mxu0
        %526 = vdwg.mxu0
        %v527 = vmul.f32 %v524, 0.35355338
        %v528 = vld [vmem:[%s324] sm:$0x1]
        %v529 = vld [vmem:[#allocation2] sm:$0xff]
        %v531 = vlaneseq
        %v532 = vshrl.u32 %v531, 7
        %v533 = vsub.s32 0, %v532
        %v534 = vrot.slane %v528, %v533
        %vm536 = vcmask 64512
        %v538 = vsel %vm536, %v527, 0
        %v541 = vsel %vm536, %v529, 0
        %543 = vmatprep.subr.mxu0 0.0
        %544 = vmatpush1.xpose.msra.mxu0 %v541
        %545 = vmatprep.subr.mxu0 0.0
        %546 = vmatpush1.xpose.msra.mxu0 0.0
        %547 = vmatprep.subr.mxu0 0.0
        %548 = vmatpush1.xpose.msra.mxu0 0.0
        %549 = vmatprep.subr.mxu0 0.0
        %550 = vmatpush1.xpose.msra.mxu0 0.0
        %551 = vmatprep.subr.mxu0 0.0
        %552 = vmatpush1.xpose.msra.mxu0 0.0
        %553 = vmatprep.subr.mxu0 0.0
        %554 = vmatpush1.xpose.msra.mxu0 0.0
        %555 = vmatprep.subr.mxu0 0.0
        %556 = vmatpush1.xpose.msra.mxu0 0.0
        %557 = vmatprep.subr.mxu0 0.0
        %558 = vmatpush1.xpose.msra.mxu0 0.0
        %559 = vmatprep.subr.mxu0 0.0
        %560 = vmatpush1.xpose.msra.mxu0 0.0
        %561 = vmatprep.subr.mxu0 0.0
        %562 = vmatpush1.xpose.msra.mxu0 0.0
        %563 = vmatprep.subr.mxu0 0.0
        %564 = vmatpush1.xpose.msra.mxu0 0.0
        %565 = vmatprep.subr.mxu0 0.0
        %566 = vmatpush1.xpose.msra.mxu0 0.0
        %567 = vmatprep.subr.mxu0 0.0
        %568 = vmatpush1.xpose.msra.mxu0 0.0
        %569 = vmatprep.subr.mxu0 0.0
        %570 = vmatpush1.xpose.msra.mxu0 0.0
        %571 = vmatprep.subr.mxu0 0.0
        %572 = vmatpush1.xpose.msra.mxu0 0.0
        %573 = vmatprep.subr.mxu0 0.0
        %574 = vmatpush1.xpose.msra.mxu0 0.0
        %575 = vmatprep.subr.mxu0 0.0
        %576 = vmatpush1.xpose.msra.mxu0 0.0
        %577 = vmatprep.subr.mxu0 0.0
        %578 = vmatpush1.xpose.msra.mxu0 0.0
        %579 = vmatprep.subr.mxu0 0.0
        %580 = vmatpush1.xpose.msra.mxu0 0.0
        %581 = vmatprep.subr.mxu0 0.0
        %582 = vmatpush1.xpose.msra.mxu0 0.0
        %583 = vmatprep.subr.mxu0 0.0
        %584 = vmatpush1.xpose.msra.mxu0 0.0
        %585 = vmatprep.subr.mxu0 0.0
        %586 = vmatpush1.xpose.msra.mxu0 0.0
        %587 = vmatprep.subr.mxu0 0.0
        %588 = vmatpush1.xpose.msra.mxu0 0.0
        %589 = vmatprep.subr.mxu0 0.0
        %590 = vmatpush1.xpose.msra.mxu0 0.0
        %591 = vmatprep.subr.mxu0 0.0
        %592 = vmatpush1.xpose.msra.mxu0 0.0
        %593 = vmatprep.subr.mxu0 0.0
        %594 = vmatpush1.xpose.msra.mxu0 0.0
        %595 = vmatprep.subr.mxu0 0.0
        %596 = vmatpush1.xpose.msra.mxu0 0.0
        %597 = vmatprep.subr.mxu0 0.0
        %598 = vmatpush1.xpose.msra.mxu0 0.0
        %599 = vmatprep.subr.mxu0 0.0
        %600 = vmatpush1.xpose.msra.mxu0 0.0
        %601 = vmatprep.subr.mxu0 0.0
        %602 = vmatpush1.xpose.msra.mxu0 0.0
        %603 = vmatprep.subr.mxu0 0.0
        %604 = vmatpush1.xpose.msra.mxu0 0.0
        %605 = vmatprep.subr.mxu0 0.0
        %606 = vmatpush1.xpose.msra.mxu0 0.0
        %607 = vmatprep.mubr.f32.mxu0 0.0
        %608 = vmatmul.mubr.f32.gmra.mrb[0].mxu0 %v538
        %v609 = vpop.f32.mrb[0].mxu0
        %v610 = vadd.f32 %v534, %v609
        %v611 = vpop.f32.mrb[0].mxu0
        %612 = vdwg.mxu0
        %v613 = vsel %vm536, %v610, -inf
        %614 = vmax.xlane.f32.xlu0 %v613
        %v615 = vpop.xlane.xlu0 %614
        %v616 = vsub.f32 %v610, %v615
        %v617 = vmul.f32 %v616, 1.442695
        %v618 = vpow.pop %v617
        %v619 = vsel %vm536, %v618, 0.0
        %620 = vadd.xlane.f32.xlu0 %v619
        %v621 = vpop.xlane.xlu0 %620
        %v622 = vrcp.pop %v621
        %v623 = vmul.f32 %v618, %v622
        %624 = vst.msk [vmem:[%s321] sm:$0xff] %vm536, %v623
        %625 = vrot.lane.b32.xlu0 %v529, 96
        %v626 = vpop.permute.xlu0 %625
        %v629 = vsel %vm536, %v623, 0
        %631 = vmatprep.subr.mxu0 0.0
        %632 = vmatpush1.msra.mxu0 %v626
        %633 = vmatprep.subr.mxu0 0.0
        %634 = vmatpush1.msra.mxu0 0.0
        %635 = vmatprep.subr.mxu0 0.0
        %636 = vmatpush1.msra.mxu0 0.0
        %637 = vmatprep.subr.mxu0 0.0
        %638 = vmatpush1.msra.mxu0 0.0
        %639 = vmatprep.subr.mxu0 0.0
        %640 = vmatpush1.msra.mxu0 0.0
        %641 = vmatprep.subr.mxu0 0.0
        %642 = vmatpush1.msra.mxu0 0.0
        %643 = vmatprep.subr.mxu0 0.0
        %644 = vmatpush1.msra.mxu0 0.0
        %645 = vmatprep.subr.mxu0 0.0
        %646 = vmatpush1.msra.mxu0 0.0
        %647 = vmatprep.subr.mxu0 0.0
        %648 = vmatpush1.msra.mxu0 0.0
        %649 = vmatprep.subr.mxu0 0.0
        %650 = vmatpush1.msra.mxu0 0.0
        %651 = vmatprep.subr.mxu0 0.0
        %652 = vmatpush1.msra.mxu0 0.0
        %653 = vmatprep.subr.mxu0 0.0
        %654 = vmatpush1.msra.mxu0 0.0
        %655 = vmatprep.subr.mxu0 0.0
        %656 = vmatpush1.msra.mxu0 0.0
        %657 = vmatprep.subr.mxu0 0.0
        %658 = vmatpush1.msra.mxu0 0.0
        %659 = vmatprep.subr.mxu0 0.0
        %660 = vmatpush1.msra.mxu0 0.0
        %661 = vmatprep.subr.mxu0 0.0
        %662 = vmatpush1.msra.mxu0 0.0
        %663 = vmatprep.subr.mxu0 0.0
        %664 = vmatpush1.msra.mxu0 0.0
        %665 = vmatprep.subr.mxu0 0.0
        %666 = vmatpush1.msra.mxu0 0.0
        %667 = vmatprep.subr.mxu0 0.0
        %668 = vmatpush1.msra.mxu0 0.0
        %669 = vmatprep.subr.mxu0 0.0
        %670 = vmatpush1.msra.mxu0 0.0
        %671 = vmatprep.subr.mxu0 0.0
        %672 = vmatpush1.msra.mxu0 0.0
        %673 = vmatprep.subr.mxu0 0.0
        %674 = vmatpush1.msra.mxu0 0.0
        %675 = vmatprep.subr.mxu0 0.0
        %676 = vmatpush1.msra.mxu0 0.0
        %677 = vmatprep.subr.mxu0 0.0
        %678 = vmatpush1.msra.mxu0 0.0
        %679 = vmatprep.subr.mxu0 0.0
        %680 = vmatpush1.msra.mxu0 0.0
        %681 = vmatprep.subr.mxu0 0.0
        %682 = vmatpush1.msra.mxu0 0.0
        %683 = vmatprep.subr.mxu0 0.0
        %684 = vmatpush1.msra.mxu0 0.0
        %685 = vmatprep.subr.mxu0 0.0
        %686 = vmatpush1.msra.mxu0 0.0
        %687 = vmatprep.subr.mxu0 0.0
        %688 = vmatpush1.msra.mxu0 0.0
        %689 = vmatprep.subr.mxu0 0.0
        %690 = vmatpush1.msra.mxu0 0.0
        %691 = vmatprep.subr.mxu0 0.0
        %692 = vmatpush1.msra.mxu0 0.0
        %693 = vmatprep.subr.mxu0 0.0
        %694 = vmatpush1.msra.mxu0 0.0
        %695 = vmatprep.mubr.f32.mxu0 0.0
        %696 = vmatmul.mubr.f32.gmra.mrb[0].mxu0 %v629
        %v697 = vpop.f32.mrb[0].mxu0
        %v698 = vadd.f32 0.0, %v697
        %v699 = vpop.f32.mrb[0].mxu0
        %700 = vdwg.mxu0
        %v701 = vld [vmem:[#allocation2] sm:$0xff]
        %702 = vrot.lane.b32.xlu0 %v527, 120
        %v703 = vpop.permute.xlu0 %702
        %705 = vrot.lane.b32.xlu0 %v701, 120
        %v706 = vpop.permute.xlu0 %705
        %v707 = vsel %vm536, %v703, 0
        %v709 = vsel %vm536, %v706, 0
        %711 = vmatprep.subr.mxu0 0.0
        %712 = vmatpush1.xpose.msra.mxu0 %v709
        %713 = vmatprep.subr.mxu0 0.0
        %714 = vmatpush1.xpose.msra.mxu0 0.0
        %715 = vmatprep.subr.mxu0 0.0
        %716 = vmatpush1.xpose.msra.mxu0 0.0
        %717 = vmatprep.subr.mxu0 0.0
        %718 = vmatpush1.xpose.msra.mxu0 0.0
        %719 = vmatprep.subr.mxu0 0.0
        %720 = vmatpush1.xpose.msra.mxu0 0.0
        %721 = vmatprep.subr.mxu0 0.0
        %722 = vmatpush1.xpose.msra.mxu0 0.0
        %723 = vmatprep.subr.mxu0 0.0
        %724 = vmatpush1.xpose.msra.mxu0 0.0
        %725 = vmatprep.subr.mxu0 0.0
        %726 = vmatpush1.xpose.msra.mxu0 0.0
        %727 = vmatprep.subr.mxu0 0.0
        %728 = vmatpush1.xpose.msra.mxu0 0.0
        %729 = vmatprep.subr.mxu0 0.0
        %730 = vmatpush1.xpose.msra.mxu0 0.0
        %731 = vmatprep.subr.mxu0 0.0
        %732 = vmatpush1.xpose.msra.mxu0 0.0
        %733 = vmatprep.subr.mxu0 0.0
        %734 = vmatpush1.xpose.msra.mxu0 0.0
        %735 = vmatprep.subr.mxu0 0.0
        %736 = vmatpush1.xpose.msra.mxu0 0.0
        %737 = vmatprep.subr.mxu0 0.0
        %738 = vmatpush1.xpose.msra.mxu0 0.0
        %739 = vmatprep.subr.mxu0 0.0
        %740 = vmatpush1.xpose.msra.mxu0 0.0
        %741 = vmatprep.subr.mxu0 0.0
        %742 = vmatpush1.xpose.msra.mxu0 0.0
        %743 = vmatprep.subr.mxu0 0.0
        %744 = vmatpush1.xpose.msra.mxu0 0.0
        %745 = vmatprep.subr.mxu0 0.0
        %746 = vmatpush1.xpose.msra.mxu0 0.0
        %747 = vmatprep.subr.mxu0 0.0
        %748 = vmatpush1.xpose.msra.mxu0 0.0
        %749 = vmatprep.subr.mxu0 0.0
        %750 = vmatpush1.xpose.msra.mxu0 0.0
        %751 = vmatprep.subr.mxu0 0.0
        %752 = vmatpush1.xpose.msra.mxu0 0.0
        %753 = vmatprep.subr.mxu0 0.0
        %754 = vmatpush1.xpose.msra.mxu0 0.0
        %755 = vmatprep.subr.mxu0 0.0
        %756 = vmatpush1.xpose.msra.mxu0 0.0
        %757 = vmatprep.subr.mxu0 0.0
        %758 = vmatpush1.xpose.msra.mxu0 0.0
        %759 = vmatprep.subr.mxu0 0.0
        %760 = vmatpush1.xpose.msra.mxu0 0.0
        %761 = vmatprep.subr.mxu0 0.0
        %762 = vmatpush1.xpose.msra.mxu0 0.0
        %763 = vmatprep.subr.mxu0 0.0
        %764 = vmatpush1.xpose.msra.mxu0 0.0
        %765 = vmatprep.subr.mxu0 0.0
        %766 = vmatpush1.xpose.msra.mxu0 0.0
        %767 = vmatprep.subr.mxu0 0.0
        %768 = vmatpush1.xpose.msra.mxu0 0.0
        %769 = vmatprep.subr.mxu0 0.0
        %770 = vmatpush1.xpose.msra.mxu0 0.0
        %771 = vmatprep.subr.mxu0 0.0
        %772 = vmatpush1.xpose.msra.mxu0 0.0
        %773 = vmatprep.subr.mxu0 0.0
        %774 = vmatpush1.xpose.msra.mxu0 0.0
        %775 = vmatprep.mubr.f32.mxu0 0.0
        %776 = vmatmul.mubr.f32.gmra.mrb[0].mxu0 %v707
        %v777 = vpop.f32.mrb[0].mxu0
        %v778 = vadd.f32 %v534, %v777
        %v779 = vpop.f32.mrb[0].mxu0
        %780 = vdwg.mxu0
        %v781 = vsel %vm536, %v778, -inf
        %782 = vmax.xlane.f32.xlu0 %v781
        %v783 = vpop.xlane.xlu0 %782
        %v784 = vsub.f32 %v778, %v783
        %v785 = vmul.f32 %v784, 1.442695
        %v786 = vpow.pop %v785
        %v787 = vsel %vm536, %v786, 0.0
        %788 = vadd.xlane.f32.xlu0 %v787
        %v789 = vpop.xlane.xlu0 %788
        %v790 = vrcp.pop %v789
        %v791 = vmul.f32 %v786, %v790
        %s792 = scalar_lea.vmem %s321, 8 [#allocation9]
        %793 = vst.msk [vmem:[%s792] sm:$0xff] %vm536, %v791
        %794 = vrot.lane.b32.xlu0 %v701, 88
        %v795 = vpop.permute.xlu0 %794
        %v798 = vsel %vm536, %v791, 0
        %800 = vmatprep.subr.mxu0 0.0
        %801 = vmatpush1.msra.mxu0 %v795
        %802 = vmatprep.subr.mxu0 0.0
        %803 = vmatpush1.msra.mxu0 0.0
        %804 = vmatprep.subr.mxu0 0.0
        %805 = vmatpush1.msra.mxu0 0.0
        %806 = vmatprep.subr.mxu0 0.0
        %807 = vmatpush1.msra.mxu0 0.0
        %808 = vmatprep.subr.mxu0 0.0
        %809 = vmatpush1.msra.mxu0 0.0
        %810 = vmatprep.subr.mxu0 0.0
        %811 = vmatpush1.msra.mxu0 0.0
        %812 = vmatprep.subr.mxu0 0.0
        %813 = vmatpush1.msra.mxu0 0.0
        %814 = vmatprep.subr.mxu0 0.0
        %815 = vmatpush1.msra.mxu0 0.0
        %816 = vmatprep.subr.mxu0 0.0
        %817 = vmatpush1.msra.mxu0 0.0
        %818 = vmatprep.subr.mxu0 0.0
        %819 = vmatpush1.msra.mxu0 0.0
        %820 = vmatprep.subr.mxu0 0.0
        %821 = vmatpush1.msra.mxu0 0.0
        %822 = vmatprep.subr.mxu0 0.0
        %823 = vmatpush1.msra.mxu0 0.0
        %824 = vmatprep.subr.mxu0 0.0
        %825 = vmatpush1.msra.mxu0 0.0
        %826 = vmatprep.subr.mxu0 0.0
        %827 = vmatpush1.msra.mxu0 0.0
        %828 = vmatprep.subr.mxu0 0.0
        %829 = vmatpush1.msra.mxu0 0.0
        %830 = vmatprep.subr.mxu0 0.0
        %831 = vmatpush1.msra.mxu0 0.0
        %832 = vmatprep.subr.mxu0 0.0
        %833 = vmatpush1.msra.mxu0 0.0
        %834 = vmatprep.subr.mxu0 0.0
        %835 = vmatpush1.msra.mxu0 0.0
        %836 = vmatprep.subr.mxu0 0.0
        %837 = vmatpush1.msra.mxu0 0.0
        %838 = vmatprep.subr.mxu0 0.0
        %839 = vmatpush1.msra.mxu0 0.0
        %840 = vmatprep.subr.mxu0 0.0
        %841 = vmatpush1.msra.mxu0 0.0
        %842 = vmatprep.subr.mxu0 0.0
        %843 = vmatpush1.msra.mxu0 0.0
        %844 = vmatprep.subr.mxu0 0.0
        %845 = vmatpush1.msra.mxu0 0.0
        %846 = vmatprep.subr.mxu0 0.0
        %847 = vmatpush1.msra.mxu0 0.0
        %848 = vmatprep.subr.mxu0 0.0
        %849 = vmatpush1.msra.mxu0 0.0
        %850 = vmatprep.subr.mxu0 0.0
        %851 = vmatpush1.msra.mxu0 0.0
        %852 = vmatprep.subr.mxu0 0.0
        %853 = vmatpush1.msra.mxu0 0.0
        %854 = vmatprep.subr.mxu0 0.0
        %855 = vmatpush1.msra.mxu0 0.0
        %856 = vmatprep.subr.mxu0 0.0
        %857 = vmatpush1.msra.mxu0 0.0
        %858 = vmatprep.subr.mxu0 0.0
        %859 = vmatpush1.msra.mxu0 0.0
        %860 = vmatprep.subr.mxu0 0.0
        %861 = vmatpush1.msra.mxu0 0.0
        %862 = vmatprep.subr.mxu0 0.0
        %863 = vmatpush1.msra.mxu0 0.0
        %864 = vmatprep.mubr.f32.mxu0 0.0
        %865 = vmatmul.mubr.f32.gmra.mrb[0].mxu0 %v798
        %v866 = vpop.f32.mrb[0].mxu0
        %v867 = vadd.f32 0.0, %v866
        %v868 = vpop.f32.mrb[0].mxu0
        %869 = vdwg.mxu0
        %v870 = vld [vmem:[#allocation2] sm:$0xff]
        %871 = vrot.lane.b32.xlu0 %v527, 112
        %v872 = vpop.permute.xlu0 %871
        %874 = vrot.lane.b32.xlu0 %v870, 112
        %v875 = vpop.permute.xlu0 %874
        %v876 = vsel %vm536, %v872, 0
        %v878 = vsel %vm536, %v875, 0
        %880 = vmatprep.subr.mxu0 0.0
        %881 = vmatpush1.xpose.msra.mxu0 %v878
        %882 = vmatprep.subr.mxu0 0.0
        %883 = vmatpush1.xpose.msra.mxu0 0.0
        %884 = vmatprep.subr.mxu0 0.0
        %885 = vmatpush1.xpose.msra.mxu0 0.0
        %886 = vmatprep.subr.mxu0 0.0
        %887 = vmatpush1.xpose.msra.mxu0 0.0
        %888 = vmatprep.subr.mxu0 0.0
        %889 = vmatpush1.xpose.msra.mxu0 0.0
        %890 = vmatprep.subr.mxu0 0.0
        %891 = vmatpush1.xpose.msra.mxu0 0.0
        %892 = vmatprep.subr.mxu0 0.0
        %893 = vmatpush1.xpose.msra.mxu0 0.0
        %894 = vmatprep.subr.mxu0 0.0
        %895 = vmatpush1.xpose.msra.mxu0 0.0
        %896 = vmatprep.subr.mxu0 0.0
        %897 = vmatpush1.xpose.msra.mxu0 0.0
        %898 = vmatprep.subr.mxu0 0.0
        %899 = vmatpush1.xpose.msra.mxu0 0.0
        %900 = vmatprep.subr.mxu0 0.0
        %901 = vmatpush1.xpose.msra.mxu0 0.0
        %902 = vmatprep.subr.mxu0 0.0
        %903 = vmatpush1.xpose.msra.mxu0 0.0
        %904 = vmatprep.subr.mxu0 0.0
        %905 = vmatpush1.xpose.msra.mxu0 0.0
        %906 = vmatprep.subr.mxu0 0.0
        %907 = vmatpush1.xpose.msra.mxu0 0.0
        %908 = vmatprep.subr.mxu0 0.0
        %909 = vmatpush1.xpose.msra.mxu0 0.0
        %910 = vmatprep.subr.mxu0 0.0
        %911 = vmatpush1.xpose.msra.mxu0 0.0
        %912 = vmatprep.subr.mxu0 0.0
        %913 = vmatpush1.xpose.msra.mxu0 0.0
        %914 = vmatprep.subr.mxu0 0.0
        %915 = vmatpush1.xpose.msra.mxu0 0.0
        %916 = vmatprep.subr.mxu0 0.0
        %917 = vmatpush1.xpose.msra.mxu0 0.0
        %918 = vmatprep.subr.mxu0 0.0
        %919 = vmatpush1.xpose.msra.mxu0 0.0
        %920 = vmatprep.subr.mxu0 0.0
        %921 = vmatpush1.xpose.msra.mxu0 0.0
        %922 = vmatprep.subr.mxu0 0.0
        %923 = vmatpush1.xpose.msra.mxu0 0.0
        %924 = vmatprep.subr.mxu0 0.0
        %925 = vmatpush1.xpose.msra.mxu0 0.0
        %926 = vmatprep.subr.mxu0 0.0
        %927 = vmatpush1.xpose.msra.mxu0 0.0
        %928 = vmatprep.subr.mxu0 0.0
        %929 = vmatpush1.xpose.msra.mxu0 0.0
        %930 = vmatprep.subr.mxu0 0.0
        %931 = vmatpush1.xpose.msra.mxu0 0.0
        %932 = vmatprep.subr.mxu0 0.0
        %933 = vmatpush1.xpose.msra.mxu0 0.0
        %934 = vmatprep.subr.mxu0 0.0
        %935 = vmatpush1.xpose.msra.mxu0 0.0
        %936 = vmatprep.subr.mxu0 0.0
        %937 = vmatpush1.xpose.msra.mxu0 0.0
        %938 = vmatprep.subr.mxu0 0.0
        %939 = vmatpush1.xpose.msra.mxu0 0.0
        %940 = vmatprep.subr.mxu0 0.0
        %941 = vmatpush1.xpose.msra.mxu0 0.0
        %942 = vmatprep.subr.mxu0 0.0
        %943 = vmatpush1.xpose.msra.mxu0 0.0
        %944 = vmatprep.mubr.f32.mxu0 0.0
        %945 = vmatmul.mubr.f32.gmra.mrb[0].mxu0 %v876
        %v946 = vpop.f32.mrb[0].mxu0
        %v947 = vadd.f32 %v534, %v946
        %v948 = vpop.f32.mrb[0].mxu0
        %949 = vdwg.mxu0
        %v950 = vsel %vm536, %v947, -inf
        %951 = vmax.xlane.f32.xlu0 %v950
        %v952 = vpop.xlane.xlu0 %951
        %v953 = vsub.f32 %v947, %v952
        %v954 = vmul.f32 %v953, 1.442695
        %v955 = vpow.pop %v954
        %v956 = vsel %vm536, %v955, 0.0
        %957 = vadd.xlane.f32.xlu0 %v956
        %v958 = vpop.xlane.xlu0 %957
        %v959 = vrcp.pop %v958
        %v960 = vmul.f32 %v955, %v959
        %s961 = scalar_lea.vmem %s321, 16 [#allocation9]
        %962 = vst.msk [vmem:[%s961] sm:$0xff] %vm536, %v960
        %963 = vrot.lane.b32.xlu0 %v870, 80
        %v964 = vpop.permute.xlu0 %963
        %v967 = vsel %vm536, %v960, 0
        %969 = vmatprep.subr.mxu0 0.0
        %970 = vmatpush1.msra.mxu0 %v964
        %971 = vmatprep.subr.mxu0 0.0
        %972 = vmatpush1.msra.mxu0 0.0
        %973 = vmatprep.subr.mxu0 0.0
        %974 = vmatpush1.msra.mxu0 0.0
        %975 = vmatprep.subr.mxu0 0.0
        %976 = vmatpush1.msra.mxu0 0.0
        %977 = vmatprep.subr.mxu0 0.0
        %978 = vmatpush1.msra.mxu0 0.0
        %979 = vmatprep.subr.mxu0 0.0
        %980 = vmatpush1.msra.mxu0 0.0
        %981 = vmatprep.subr.mxu0 0.0
        %982 = vmatpush1.msra.mxu0 0.0
        %983 = vmatprep.subr.mxu0 0.0
        %984 = vmatpush1.msra.mxu0 0.0
        %985 = vmatprep.subr.mxu0 0.0
        %986 = vmatpush1.msra.mxu0 0.0
        %987 = vmatprep.subr.mxu0 0.0
        %988 = vmatpush1.msra.mxu0 0.0
        %989 = vmatprep.subr.mxu0 0.0
        %990 = vmatpush1.msra.mxu0 0.0
        %991 = vmatprep.subr.mxu0 0.0
        %992 = vmatpush1.msra.mxu0 0.0
        %993 = vmatprep.subr.mxu0 0.0
        %994 = vmatpush1.msra.mxu0 0.0
        %995 = vmatprep.subr.mxu0 0.0
        %996 = vmatpush1.msra.mxu0 0.0
        %997 = vmatprep.subr.mxu0 0.0
        %998 = vmatpush1.msra.mxu0 0.0
        %999 = vmatprep.subr.mxu0 0.0
        %1000 = vmatpush1.msra.mxu0 0.0
        %1001 = vmatprep.subr.mxu0 0.0
        %1002 = vmatpush1.msra.mxu0 0.0
        %1003 = vmatprep.subr.mxu0 0.0
        %1004 = vmatpush1.msra.mxu0 0.0
        %1005 = vmatprep.subr.mxu0 0.0
        %1006 = vmatpush1.msra.mxu0 0.0
        %1007 = vmatprep.subr.mxu0 0.0
        %1008 = vmatpush1.msra.mxu0 0.0
        %1009 = vmatprep.subr.mxu0 0.0
        %1010 = vmatpush1.msra.mxu0 0.0
        %1011 = vmatprep.subr.mxu0 0.0
        %1012 = vmatpush1.msra.mxu0 0.0
        %1013 = vmatprep.subr.mxu0 0.0
        %1014 = vmatpush1.msra.mxu0 0.0
        %1015 = vmatprep.subr.mxu0 0.0
        %1016 = vmatpush1.msra.mxu0 0.0
        %1017 = vmatprep.subr.mxu0 0.0
        %1018 = vmatpush1.msra.mxu0 0.0
        %1019 = vmatprep.subr.mxu0 0.0
        %1020 = vmatpush1.msra.mxu0 0.0
        %1021 = vmatprep.subr.mxu0 0.0
        %1022 = vmatpush1.msra.mxu0 0.0
        %1023 = vmatprep.subr.mxu0 0.0
        %1024 = vmatpush1.msra.mxu0 0.0
        %1025 = vmatprep.subr.mxu0 0.0
        %1026 = vmatpush1.msra.mxu0 0.0
        %1027 = vmatprep.subr.mxu0 0.0
        %1028 = vmatpush1.msra.mxu0 0.0
        %1029 = vmatprep.subr.mxu0 0.0
        %1030 = vmatpush1.msra.mxu0 0.0
        %1031 = vmatprep.subr.mxu0 0.0
        %1032 = vmatpush1.msra.mxu0 0.0
        %1033 = vmatprep.mubr.f32.mxu0 0.0
        %1034 = vmatmul.mubr.f32.gmra.mrb[0].mxu0 %v967
        %v1035 = vpop.f32.mrb[0].mxu0
        %v1036 = vadd.f32 0.0, %v1035
        %v1037 = vpop.f32.mrb[0].mxu0
        %1038 = vdwg.mxu0
        %v1039 = vld [vmem:[#allocation2] sm:$0xff]
        %1040 = vrot.lane.b32.xlu0 %v527, 104
        %v1041 = vpop.permute.xlu0 %1040
        %1043 = vrot.lane.b32.xlu0 %v1039, 104
        %v1044 = vpop.permute.xlu0 %1043
        %v1045 = vsel %vm536, %v1041, 0
        %v1047 = vsel %vm536, %v1044, 0
        %1049 = vmatprep.subr.mxu0 0.0
        %1050 = vmatpush1.xpose.msra.mxu0 %v1047
        %1051 = vmatprep.subr.mxu0 0.0
        %1052 = vmatpush1.xpose.msra.mxu0 0.0
        %1053 = vmatprep.subr.mxu0 0.0
        %1054 = vmatpush1.xpose.msra.mxu0 0.0
        %1055 = vmatprep.subr.mxu0 0.0
        %1056 = vmatpush1.xpose.msra.mxu0 0.0
        %1057 = vmatprep.subr.mxu0 0.0
        %1058 = vmatpush1.xpose.msra.mxu0 0.0
        %1059 = vmatprep.subr.mxu0 0.0
        %1060 = vmatpush1.xpose.msra.mxu0 0.0
        %1061 = vmatprep.subr.mxu0 0.0
        %1062 = vmatpush1.xpose.msra.mxu0 0.0
        %1063 = vmatprep.subr.mxu0 0.0
        %1064 = vmatpush1.xpose.msra.mxu0 0.0
        %1065 = vmatprep.subr.mxu0 0.0
        %1066 = vmatpush1.xpose.msra.mxu0 0.0
        %1067 = vmatprep.subr.mxu0 0.0
        %1068 = vmatpush1.xpose.msra.mxu0 0.0
        %1069 = vmatprep.subr.mxu0 0.0
        %1070 = vmatpush1.xpose.msra.mxu0 0.0
        %1071 = vmatprep.subr.mxu0 0.0
        %1072 = vmatpush1.xpose.msra.mxu0 0.0
        %1073 = vmatprep.subr.mxu0 0.0
        %1074 = vmatpush1.xpose.msra.mxu0 0.0
        %1075 = vmatprep.subr.mxu0 0.0
        %1076 = vmatpush1.xpose.msra.mxu0 0.0
        %1077 = vmatprep.subr.mxu0 0.0
        %1078 = vmatpush1.xpose.msra.mxu0 0.0
        %1079 = vmatprep.subr.mxu0 0.0
        %1080 = vmatpush1.xpose.msra.mxu0 0.0
        %1081 = vmatprep.subr.mxu0 0.0
        %1082 = vmatpush1.xpose.msra.mxu0 0.0
        %1083 = vmatprep.subr.mxu0 0.0
        %1084 = vmatpush1.xpose.msra.mxu0 0.0
        %1085 = vmatprep.subr.mxu0 0.0
        %1086 = vmatpush1.xpose.msra.mxu0 0.0
        %1087 = vmatprep.subr.mxu0 0.0
        %1088 = vmatpush1.xpose.msra.mxu0 0.0
        %1089 = vmatprep.subr.mxu0 0.0
        %1090 = vmatpush1.xpose.msra.mxu0 0.0
        %1091 = vmatprep.subr.mxu0 0.0
        %1092 = vmatpush1.xpose.msra.mxu0 0.0
        %1093 = vmatprep.subr.mxu0 0.0
        %1094 = vmatpush1.xpose.msra.mxu0 0.0
        %1095 = vmatprep.subr.mxu0 0.0
        %1096 = vmatpush1.xpose.msra.mxu0 0.0
        %1097 = vmatprep.subr.mxu0 0.0
        %1098 = vmatpush1.xpose.msra.mxu0 0.0
        %1099 = vmatprep.subr.mxu0 0.0
        %1100 = vmatpush1.xpose.msra.mxu0 0.0
        %1101 = vmatprep.subr.mxu0 0.0
        %1102 = vmatpush1.xpose.msra.mxu0 0.0
        %1103 = vmatprep.subr.mxu0 0.0
        %1104 = vmatpush1.xpose.msra.mxu0 0.0
        %1105 = vmatprep.subr.mxu0 0.0
        %1106 = vmatpush1.xpose.msra.mxu0 0.0
        %1107 = vmatprep.subr.mxu0 0.0
        %1108 = vmatpush1.xpose.msra.mxu0 0.0
        %1109 = vmatprep.subr.mxu0 0.0
        %1110 = vmatpush1.xpose.msra.mxu0 0.0
        %1111 = vmatprep.subr.mxu0 0.0
        %1112 = vmatpush1.xpose.msra.mxu0 0.0
        %1113 = vmatprep.mubr.f32.mxu0 0.0
        %1114 = vmatmul.mubr.f32.gmra.mrb[0].mxu0 %v1045
        %v1115 = vpop.f32.mrb[0].mxu0
        %v1116 = vadd.f32 %v534, %v1115
        %v1117 = vpop.f32.mrb[0].mxu0
        %1118 = vdwg.mxu0
        %v1119 = vsel %vm536, %v1116, -inf
        %1120 = vmax.xlane.f32.xlu0 %v1119
        %v1121 = vpop.xlane.xlu0 %1120
        %v1122 = vsub.f32 %v1116, %v1121
        %v1123 = vmul.f32 %v1122, 1.442695
        %v1124 = vpow.pop %v1123
        %v1125 = vsel %vm536, %v1124, 0.0
        %1126 = vadd.xlane.f32.xlu0 %v1125
        %v1127 = vpop.xlane.xlu0 %1126
        %v1128 = vrcp.pop %v1127
        %v1129 = vmul.f32 %v1124, %v1128
        %s1130 = scalar_lea.vmem %s321, 24 [#allocation9]
        %1131 = vst.msk [vmem:[%s1130] sm:$0xff] %vm536, %v1129
        %1132 = vrot.lane.b32.xlu0 %v1039, 72
        %v1133 = vpop.permute.xlu0 %1132
        %v1136 = vsel %vm536, %v1129, 0
        %1138 = vmatprep.subr.mxu0 0.0
        %1139 = vmatpush1.msra.mxu0 %v1133
        %1140 = vmatprep.subr.mxu0 0.0
        %1141 = vmatpush1.msra.mxu0 0.0
        %1142 = vmatprep.subr.mxu0 0.0
        %1143 = vmatpush1.msra.mxu0 0.0
        %1144 = vmatprep.subr.mxu0 0.0
        %1145 = vmatpush1.msra.mxu0 0.0
        %1146 = vmatprep.subr.mxu0 0.0
        %1147 = vmatpush1.msra.mxu0 0.0
        %1148 = vmatprep.subr.mxu0 0.0
        %1149 = vmatpush1.msra.mxu0 0.0
        %1150 = vmatprep.subr.mxu0 0.0
        %1151 = vmatpush1.msra.mxu0 0.0
        %1152 = vmatprep.subr.mxu0 0.0
        %1153 = vmatpush1.msra.mxu0 0.0
        %1154 = vmatprep.subr.mxu0 0.0
        %1155 = vmatpush1.msra.mxu0 0.0
        %1156 = vmatprep.subr.mxu0 0.0
        %1157 = vmatpush1.msra.mxu0 0.0
        %1158 = vmatprep.subr.mxu0 0.0
        %1159 = vmatpush1.msra.mxu0 0.0
        %1160 = vmatprep.subr.mxu0 0.0
        %1161 = vmatpush1.msra.mxu0 0.0
        %1162 = vmatprep.subr.mxu0 0.0
        %1163 = vmatpush1.msra.mxu0 0.0
        %1164 = vmatprep.subr.mxu0 0.0
        %1165 = vmatpush1.msra.mxu0 0.0
        %1166 = vmatprep.subr.mxu0 0.0
        %1167 = vmatpush1.msra.mxu0 0.0
        %1168 = vmatprep.subr.mxu0 0.0
        %1169 = vmatpush1.msra.mxu0 0.0
        %1170 = vmatprep.subr.mxu0 0.0
        %1171 = vmatpush1.msra.mxu0 0.0
        %1172 = vmatprep.subr.mxu0 0.0
        %1173 = vmatpush1.msra.mxu0 0.0
        %1174 = vmatprep.subr.mxu0 0.0
        %1175 = vmatpush1.msra.mxu0 0.0
        %1176 = vmatprep.subr.mxu0 0.0
        %1177 = vmatpush1.msra.mxu0 0.0
        %1178 = vmatprep.subr.mxu0 0.0
        %1179 = vmatpush1.msra.mxu0 0.0
        %1180 = vmatprep.subr.mxu0 0.0
        %1181 = vmatpush1.msra.mxu0 0.0
        %1182 = vmatprep.subr.mxu0 0.0
        %1183 = vmatpush1.msra.mxu0 0.0
        %1184 = vmatprep.subr.mxu0 0.0
        %1185 = vmatpush1.msra.mxu0 0.0
        %1186 = vmatprep.subr.mxu0 0.0
        %1187 = vmatpush1.msra.mxu0 0.0
        %1188 = vmatprep.subr.mxu0 0.0
        %1189 = vmatpush1.msra.mxu0 0.0
        %1190 = vmatprep.subr.mxu0 0.0
        %1191 = vmatpush1.msra.mxu0 0.0
        %1192 = vmatprep.subr.mxu0 0.0
        %1193 = vmatpush1.msra.mxu0 0.0
        %1194 = vmatprep.subr.mxu0 0.0
        %1195 = vmatpush1.msra.mxu0 0.0
        %1196 = vmatprep.subr.mxu0 0.0
        %1197 = vmatpush1.msra.mxu0 0.0
        %1198 = vmatprep.subr.mxu0 0.0
        %1199 = vmatpush1.msra.mxu0 0.0
        %1200 = vmatprep.subr.mxu0 0.0
        %1201 = vmatpush1.msra.mxu0 0.0
        %1202 = vmatprep.mubr.f32.mxu0 0.0
        %1203 = vmatmul.mubr.f32.gmra.mrb[0].mxu0 %v1136
        %v1204 = vpop.f32.mrb[0].mxu0
        %v1205 = vadd.f32 0.0, %v1204
        %v1206 = vpop.f32.mrb[0].mxu0
        %1207 = vdwg.mxu0
        %1209 = vrot.lane.b32.xlu0 %v867, 8
        %v1210 = vpop.permute.xlu0 %1209
        %1213 = vrot.lane.b32.xlu0 %v1036, 16
        %v1214 = vpop.permute.xlu0 %1213
        %1217 = vrot.lane.b32.xlu0 %v1205, 24
        %v1218 = vpop.permute.xlu0 %1217
        %v1220 = vsel %vm536, %v698, %v1210
        %vm1221 = vcmask 130048
        %v1222 = vsel %vm1221, %v1220, %v1214
        %vm1223 = vcmask 195584
        %v1224 = vsel %vm1223, %v1222, %v1218
        %1225 = vst.msk [vmem:[%s314] sm:$0xff] %vm453, %v1224
        %s1226 = sand.u32 %s162, 1
        %s1227 = scalar_lea.sflag [#allocation5], %s1226
        %s1228 = sand.u32 %s162, 1
        %s1229 = smul.addr %s1228, 8
        %s1230 = scalar_lea.vmem [#allocation8], %s1229
        %s1231 = sand.u32 %s192, 1
        %s1232 = scalar_lea.sflag [#allocation10], %s1231
        %s1233 = sand.u32 %s192, 1
        %s1234 = smul.addr %s1233, 32
        %s1235 = scalar_lea.vmem [#allocation9], %s1234
        // Predicated region
        $region49: #{tpu_custom_call.1} parent=35 // pred_check
          %p1236 = pneg %p172
        $region50: #{tpu_custom_call.1} parent=35 // pred_check_branch
          %1238 = sbr.rel (%p1236) target = $region52
        $region51: #{tpu_custom_call.1} parent=35 // pred_region
          %s1240 = ssub.s32 128, 128
          %1241 = vsyncadd %s1227, %s1240
          %s1242 = sadd.s32 %s33, %s34
          %s1243 = sadd.s32 %s1242, %s32
          %s1244 = smul.addr %s1243, 128
          %s1245 = scalar_lea.hbm %s4, %s1244
          %s1247 = sshll.u32 %s1230, 4
          %s1248 = int_to_ptr.vmem [resolvable:$true] %s1247
          %1250 = dma.vmem_to_hbm [thread:$0]  %s1248, 128, %s1245, %s1227
        $region52: #{tpu_custom_call.1} parent=35 // pred_fallthru
          _
        // Predicated region
        $region53: #{tpu_custom_call.1} parent=35 // pred_check
          %p1251 = pneg %p202
        $region54: #{tpu_custom_call.1} parent=35 // pred_check_branch
          %1253 = sbr.rel (%p1251) target = $region56
        $region55: #{tpu_custom_call.1} parent=35 // pred_region
          %s1254 = smul.u32 4, %s33
          %s1256 = ssub.s32 512, 512
          %1257 = vsyncadd %s1232, %s1256
          %s1258 = sadd.s32 %s34, %s1254
          %s1259 = smul.addr %s32, 4
          %s1260 = sadd.s32 %s1258, %s1259
          %s1261 = smul.addr %s1260, 128
          %s1262 = scalar_lea.hbm %s5, %s1261
          %s1263 = sshll.u32 %s1235, 4
          %s1264 = int_to_ptr.vmem [resolvable:$true] %s1263
          %1269 = dma.vmem_to_hbm [thread:$0]  %s1264, 512, %s1262, %s1232, 128, 128, 8
        $region56: #{tpu_custom_call.1} parent=35 // pred_fallthru
          _
      $region36: #{tpu_custom_call.1} parent=5 // pred_fallthru
        _
      %p1270 = scmp.le.s32.totalorder 2, %s22
      // Predicated region
      $region57: #{tpu_custom_call.1} parent=5 // pred_check
        %p1271 = pneg %p1270
      $region58: #{tpu_custom_call.1} parent=5 // pred_check_branch
        %1273 = sbr.rel (%p1271) target = $region60
      $region59: #{tpu_custom_call.1} parent=5 // pred_region
        %s1274 = ssub.s32 %s22, 2
        // Predicated region
        $region61: #{tpu_custom_call.1} parent=59 // pred_check
          %p1275 = pneg %p178
        $region62: #{tpu_custom_call.1} parent=59 // pred_check_branch
          %1277 = sbr.rel (%p1275) target = $region64
        $region63: #{tpu_custom_call.1} parent=59 // pred_region
          %s1278 = sand.u32 %s163, 1
          %s1279 = scalar_lea.sflag [#allocation5], %s1278
          %s1280 = sand.u32 %s163, 1
          %s1281 = smul.addr %s1280, 8
          %s1282 = scalar_lea.vmem [#allocation8], %s1281
          %1283 = dma.done %s1279, 128
        $region64: #{tpu_custom_call.1} parent=59 // pred_fallthru
          _
        // Predicated region
        $region65: #{tpu_custom_call.1} parent=59 // pred_check
          %p1284 = pneg %p208
        $region66: #{tpu_custom_call.1} parent=59 // pred_check_branch
          %1286 = sbr.rel (%p1284) target = $region68
        $region67: #{tpu_custom_call.1} parent=59 // pred_region
          %s1287 = sand.u32 %s193, 1
          %s1288 = scalar_lea.sflag [#allocation10], %s1287
          %s1289 = sand.u32 %s193, 1
          %s1290 = smul.addr %s1289, 32
          %s1291 = scalar_lea.vmem [#allocation9], %s1290
          %1292 = dma.done %s1288, 512
        $region68: #{tpu_custom_call.1} parent=59 // pred_fallthru
          _
      $region60: #{tpu_custom_call.1} parent=5 // pred_fallthru
        _
    $region6: #{tpu_custom_call.1} parent=1 // loop_footer
      %s26 = sadd.s32 1, %s22
    $region7: #{tpu_custom_call.1} parent=1 // loop_footer_branch
      %21 = sbr.rel target = $region3
    $region8: #{tpu_custom_call.1} parent=1 // loop_exit
      _
    %1293 = vsyncpa [#allocation4], 1
    %s1294 = scalar_lea.sflag [#allocation4], 1
    %1295 = vsyncpa %s1294, 1
    %1296 = vsyncpa [#allocation7], 1
    %1297 = vsyncpa [#allocation5], 1
    %s1298 = scalar_lea.sflag [#allocation5], 1
    %1299 = vsyncpa %s1298, 1
    %1300 = vsyncpa [#allocation10], 1
    %s1301 = scalar_lea.sflag [#allocation10], 1
    %1302 = vsyncpa %s1301, 1

</llo_original>
